<compile_context>
chip_gen: v7x
topology: tpu7x:2x2x1
jax: 0.10.0
libtpu: 0.0.40
codegen_flags: <defaults>
</compile_context>

<pallas_src>
import functools

import jax
import jax.numpy as jnp
from jax import lax
from jax.experimental import pallas as pl
from jax.experimental.pallas import tpu as pltpu

INF = 3000.0   # matches `inf = 3000` in the PyTorch module
BIG = 1e12     # distance sentinel: squared distances (incl. the +3000 padded shift) are << BIG


def _fusion_kernel(enc_ref, cxr_ref, cxc_ref, cyr_ref, cyc_ref, mask_ref,
                   wt_ref, b_ref, out_ref, *, k, approx_recip):
    # enc_ref : (Bt, N, H)    cx*/cy* : (Bt, 1, N) / (Bt, N, 1)    mask_ref: (Bt, 1, N)
    # wt_ref  : (2H, Hp)      b_ref   : (1, Hp)                    out_ref : (Bt, N, Hp)
    e = enc_ref[...]                              # (Bt, N, H) f32
    Bt, N, H = e.shape
    cd = wt_ref.dtype                             # matmul compute dtype (f32 or bf16)

    iota_r = lax.broadcasted_iota(jnp.int32, (Bt, N, N), 1)
    iota_c = lax.broadcasted_iota(jnp.int32, (Bt, N, N), 2)
    diag = iota_r == iota_c

    # pairwise squared center distances (centers already shifted by +INF for padded boxes)
    dx = cxc_ref[...] - cxr_ref[...]              # (Bt, N, N)
    dy = cyc_ref[...] - cyr_ref[...]
    dist2 = dx * dx + dy * dy
    dist2 = jnp.where(diag, BIG, dist2)           # self-distance sentinel

    # top-k smallest distances per row -> binary mask (iterative argmin, k unrolled)
    def topk_body(_, carry):
        m_acc, d = carry
        rowmin = jnp.min(d, axis=-1, keepdims=True)
        cand = jnp.where(d == rowmin, iota_c, N)  # lowest index wins ties
        amin = jnp.min(cand, axis=-1, keepdims=True)
        sel = iota_c == amin
        m_acc = jnp.where(sel, 1.0, m_acc)
        d = jnp.where(sel, BIG, d)
        return m_acc, d

    topk_mask, _ = lax.fori_loop(
        0, k, topk_body, (jnp.zeros((Bt, N, N), jnp.float32), dist2), unroll=True)
    topk_mask = jnp.where(diag, 0.0, topk_mask)                   # self-mask = 0
    topk_mask = jnp.where(mask_ref[...] != 0.0, topk_mask, 0.0)   # padded columns = 0

    # similarity: computed after the top-k phase to keep the live vreg set small;
    # contraction on the last axis of both operands -> no explicit transpose.
    em = e.astype(cd)
    sim = jnp.einsum('bnh,bmh->bnm', em, em,
                     preferred_element_type=jnp.float32)          # (Bt, N, N)

    # masked similarity (masked entries are exactly 0, per reference) + softmax
    w = jnp.where(topk_mask != 0.0, sim, 0.0)
    w_max = jnp.max(w, axis=-1, keepdims=True)
    w_exp = jnp.exp(w - w_max)
    denom = jnp.sum(w_exp, axis=-1, keepdims=True)
    if approx_recip:
        w = w_exp * pl.reciprocal(denom, approx=True)
    else:
        w = w_exp / denom

    # neighbor context: weighted sum of RoI features
    nc = jnp.einsum('bnm,bmh->bnh', w.astype(cd), em,
                    preferred_element_type=jnp.float32)           # (Bt, N, H)

    # fc(cat([encI, neighbor_context])) == encI @ W1 + nc @ W2 + bias
    w1 = wt_ref[0:H, :]                           # (H, Hp)
    w2 = wt_ref[H:2 * H, :]                       # (H, Hp)
    bias = b_ref[...]                             # (1, Hp)
    if N % 8 == 0:
        # fold the batch block into the M dimension of the MXU matmuls
        e2 = e.reshape(Bt * N, H).astype(cd)
        nc2 = nc.reshape(Bt * N, H).astype(cd)
        out = (jnp.dot(e2, w1, preferred_element_type=jnp.float32)
               + jnp.dot(nc2, w2, preferred_element_type=jnp.float32)
               + bias)
        out_ref[...] = out.reshape(out_ref.shape).astype(out_ref.dtype)
    else:
        # TODO(synk): also fold non-8-aligned N across the batch block once the
        # sublane-merging relayout is worth it; per-batch matmuls keep it correct.
        for b in range(Bt):
            out_b = (jnp.dot(e[b].astype(cd), w1, preferred_element_type=jnp.float32)
                     + jnp.dot(nc[b].astype(cd), w2, preferred_element_type=jnp.float32)
                     + bias)
            out_ref[b] = out_b.astype(out_ref.dtype)


def _pick_block_b(B, max_bt=8):
    """Largest divisor of B that is <= max_bt and still leaves >= 2 grid steps (megacore)."""
    best = 1
    for d in range(1, min(B, max_bt) + 1):
        if B % d == 0 and (B // d >= 2 or B == 1):
            best = d
    return best


def visual_context_fusion(encI, RoI_mask, spatials, fc_weight, fc_bias, k,
                          *, block_b=None, fast_math=False):
    """encI (B,N,H), RoI_mask (B,N), spatials (B,N,6), fc_weight (H,2H), fc_bias (H,)."""
    B, N, H = encI.shape
    encI = encI.astype(jnp.float32)
    mask = RoI_mask.astype(jnp.float32)
    compute_dtype = jnp.bfloat16 if fast_math else jnp.float32

    if block_b is None:
        block_b = _pick_block_b(B)
    assert B % block_b == 0, "batch must be divisible by the batch block size"

    # box centers; padded boxes get shifted by +INF (center_dist semantics)
    sp = spatials.astype(jnp.float32)
    shift = jnp.where(mask != 0.0, 0.0, INF)                  # (B, N)
    cx = (sp[..., 0] + sp[..., 2]) * 0.5 + shift
    cy = (sp[..., 1] + sp[..., 3]) * 0.5 + shift
    cx_r, cx_c = cx.reshape(B, 1, N), cx.reshape(B, N, 1)
    cy_r, cy_c = cy.reshape(B, 1, N), cy.reshape(B, N, 1)
    mask_r = mask.reshape(B, 1, N)

    # fc params: torch Linear weight is (H, 2H) -> transpose; pad the output dim to a
    # multiple of 128 lanes so the final store is lane-dense (padding sliced off below).
    Hp = H if H % 128 == 0 else ((H + 127) // 128) * 128
    wt = jnp.transpose(fc_weight).astype(compute_dtype)       # (2H, H)
    b2 = fc_bias.astype(jnp.float32).reshape(1, H)
    if Hp != H:
        wt = jnp.pad(wt, ((0, 0), (0, Hp - H)))
        b2 = jnp.pad(b2, ((0, 0), (0, Hp - H)))

    kernel = functools.partial(_fusion_kernel, k=k, approx_recip=fast_math)
    # TODO(synk): on v7x, pl.Buffered(1) on the constant fc-weight/bias specs would halve
    # their VMEM footprint; left at default double-buffering for portability.
    out = pl.pallas_call(
        kernel,
        out_shape=jax.ShapeDtypeStruct((B, N, Hp), encI.dtype),
        grid=(B // block_b,),
        in_specs=[
            pl.BlockSpec((block_b, N, H), lambda bi: (bi, 0, 0)),
            pl.BlockSpec((block_b, 1, N), lambda bi: (bi, 0, 0)),
            pl.BlockSpec((block_b, N, 1), lambda bi: (bi, 0, 0)),
            pl.BlockSpec((block_b, 1, N), lambda bi: (bi, 0, 0)),
            pl.BlockSpec((block_b, N, 1), lambda bi: (bi, 0, 0)),
            pl.BlockSpec((block_b, 1, N), lambda bi: (bi, 0, 0)),
            pl.BlockSpec((2 * H, Hp), lambda bi: (0, 0)),
            pl.BlockSpec((1, Hp), lambda bi: (0, 0)),
        ],
        out_specs=pl.BlockSpec((block_b, N, Hp), lambda bi: (bi, 0, 0)),
        compiler_params=pltpu.CompilerParams(
            dimension_semantics=("parallel",),
            vmem_limit_bytes=32 * 1024 * 1024,
        ),
    )(encI, cx_r, cx_c, cy_r, cy_c, mask_r, wt, b2)

    return out[..., :H] if Hp != H else out


def _reference(encI, RoI_mask, spatials, fc_weight, fc_bias, k):
    """Pure-JAX reference mirroring the PyTorch forward."""
    B, N, H = encI.shape
    eye = jnp.eye(N, dtype=bool)
    sim = jnp.einsum('bnh,bmh->bnm', encI, encI)
    sim = jnp.where(eye, 0.0, sim)

    cx = (spatials[..., 0] + spatials[..., 2]) / 2
    cy = (spatials[..., 1] + spatials[..., 3]) / 2
    center = jnp.stack([cx, cy], -1)
    center = jnp.where(RoI_mask[..., None] != 0, center, center + INF)
    diff = center[:, :, None, :] - center[:, None, :, :]
    dist = jnp.sqrt((diff ** 2).sum(-1))
    dist = jnp.where(eye, INF * INF, dist)

    _, idx = lax.top_k(-dist, k)                            # k smallest
    topk_mask = jax.nn.one_hot(idx, N, dtype=dist.dtype).sum(axis=-2)
    topk_mask = jnp.where(eye, 0.0, topk_mask)
    topk_mask = jnp.where(RoI_mask[:, None, :] != 0, topk_mask, 0.0)

    w = jnp.where(topk_mask != 0, sim, 0.0)
    w = jax.nn.softmax(w, axis=-1)
    nc = jnp.einsum('bnm,bmh->bnh', w, encI)
    fused = jnp.concatenate([encI, nc], axis=-1)
    return fused @ fc_weight.T + fc_bias


if __name__ == "__main__":
    B, N, H, K = 8, 8, 32, 3

    key = jax.random.PRNGKey(0)
    k0, k1, k2, k3, k4 = jax.random.split(key, 5)

    encI = jax.random.normal(k0, (B, N, H), jnp.float32)

    # synthetic normalized boxes (x1, y1, x2, y2, w, h)
    x1 = jax.random.uniform(k1, (B, N), minval=0.0, maxval=0.5)
    y1 = jax.random.uniform(k2, (B, N), minval=0.0, maxval=0.5)
    wh = jax.random.uniform(k3, (B, N, 2), minval=0.1, maxval=0.5)
    spatials = jnp.stack(
        [x1, y1, x1 + wh[..., 0], y1 + wh[..., 1], wh[..., 0], wh[..., 1]], axis=-1
    ).astype(jnp.float32)

    # varied number of valid RoIs per batch element
    lengths = jnp.array([8, 7, 5, 6, 3, 8, 2, 4], dtype=jnp.int32)
    RoI_mask = (jnp.arange(N)[None, :] < lengths[:, None]).astype(jnp.float32)

    # deterministic fc params: Linear(2H -> H)
    fc_weight = 0.05 * jax.random.normal(k4, (H, 2 * H), jnp.float32)
    fc_bias = 0.01 * jnp.arange(H, dtype=jnp.float32)

    ref = _reference(encI, RoI_mask, spatials, fc_weight, fc_bias, K)

    # precise (f32) path
    out = visual_context_fusion(encI, RoI_mask, spatials, fc_weight, fc_bias, K)
    out = jax.block_until_ready(out)
    assert out.shape == (B, N, H)
    assert jnp.allclose(out, ref, rtol=1e-4, atol=1e-4), "f32 path mismatch vs reference"

    # fast (bf16 matmuls + approx reciprocal) path
    out_fast = visual_context_fusion(encI, RoI_mask, spatials, fc_weight, fc_bias, K,
                                     fast_math=True)
    out_fast = jax.block_until_ready(out_fast)
    assert out_fast.shape == (B, N, H)
    assert jnp.allclose(out_fast, ref, rtol=5e-2, atol=5e-2), "bf16 path mismatch vs reference"

    print("KERNEL_OK")
</pallas_src>

<mosaic_0001>
module attributes {stable_mosaic.version = 11 : i64} {
  func.func @_fusion_kernel(%arg0: i32, %arg1: memref<4x8x32xf32, #tpu.memory_space<vmem>>, %arg2: memref<4x1x8xf32, #tpu.memory_space<vmem>>, %arg3: memref<4x8x1xf32, #tpu.memory_space<vmem>>, %arg4: memref<4x1x8xf32, #tpu.memory_space<vmem>>, %arg5: memref<4x8x1xf32, #tpu.memory_space<vmem>>, %arg6: memref<4x1x8xf32, #tpu.memory_space<vmem>>, %arg7: memref<64x128xf32, #tpu.memory_space<vmem>>, %arg8: memref<1x128xf32, #tpu.memory_space<vmem>>, %arg9: memref<4x8x128xf32, #tpu.memory_space<vmem>>) attributes {dimension_semantics = [#tpu.dimension_semantics<parallel>], iteration_bounds = array<i64: 2>, scalar_prefetch = 0 : i64, scratch_operands = 0 : i64, tpu.core_type = #tpu.core_type<tc>, window_params = [{transform_indices = @transform_0, window_bounds = array<i64: 4, 8, 32>}, {transform_indices = @transform_1, window_bounds = array<i64: 4, 1, 8>}, {transform_indices = @transform_2, window_bounds = array<i64: 4, 8, 1>}, {transform_indices = @transform_3, window_bounds = array<i64: 4, 1, 8>}, {transform_indices = @transform_4, window_bounds = array<i64: 4, 8, 1>}, {transform_indices = @transform_5, window_bounds = array<i64: 4, 1, 8>}, {pipeline_mode = #tpu.pipeline_mode<synchronous>, transform_indices = @transform_6, window_bounds = array<i64: 64, 128>}, {pipeline_mode = #tpu.pipeline_mode<synchronous>, transform_indices = @transform_7, window_bounds = array<i64: 1, 128>}, {transform_indices = @transform_8, window_bounds = array<i64: 4, 8, 128>}]} {
    %c0 = arith.constant 0 : index
    %c0_0 = arith.constant 0 : index
    %c0_1 = arith.constant 0 : index
    %0 = vector.load %arg1[%c0, %c0_0, %c0_1] : memref<4x8x32xf32, #tpu.memory_space<vmem>>, vector<4x8x32xf32>
    %1 = tpu.iota {dimensions = array<i32: 1>} : vector<4x8x8xi32>
    %2 = tpu.iota {dimensions = array<i32: 2>} : vector<4x8x8xi32>
    %3 = arith.cmpi eq, %1, %2 : vector<4x8x8xi32>
    %c0_2 = arith.constant 0 : index
    %c0_3 = arith.constant 0 : index
    %c0_4 = arith.constant 0 : index
    %4 = vector.load %arg3[%c0_2, %c0_3, %c0_4] : memref<4x8x1xf32, #tpu.memory_space<vmem>>, vector<4x8x1xf32>
    %c0_5 = arith.constant 0 : index
    %c0_6 = arith.constant 0 : index
    %c0_7 = arith.constant 0 : index
    %5 = vector.load %arg2[%c0_5, %c0_6, %c0_7] : memref<4x1x8xf32, #tpu.memory_space<vmem>>, vector<4x1x8xf32>
    %6 = vector.broadcast %4 : vector<4x8x1xf32> to vector<4x8x8xf32>
    %7 = vector.broadcast %5 : vector<4x1x8xf32> to vector<4x8x8xf32>
    %8 = arith.subf %6, %7 : vector<4x8x8xf32>
    %c0_8 = arith.constant 0 : index
    %c0_9 = arith.constant 0 : index
    %c0_10 = arith.constant 0 : index
    %9 = vector.load %arg5[%c0_8, %c0_9, %c0_10] : memref<4x8x1xf32, #tpu.memory_space<vmem>>, vector<4x8x1xf32>
    %c0_11 = arith.constant 0 : index
    %c0_12 = arith.constant 0 : index
    %c0_13 = arith.constant 0 : index
    %10 = vector.load %arg4[%c0_11, %c0_12, %c0_13] : memref<4x1x8xf32, #tpu.memory_space<vmem>>, vector<4x1x8xf32>
    %11 = vector.broadcast %9 : vector<4x8x1xf32> to vector<4x8x8xf32>
    %12 = vector.broadcast %10 : vector<4x1x8xf32> to vector<4x8x8xf32>
    %13 = arith.subf %11, %12 : vector<4x8x8xf32>
    %14 = arith.mulf %8, %8 : vector<4x8x8xf32>
    %15 = arith.mulf %13, %13 : vector<4x8x8xf32>
    %16 = arith.addf %14, %15 : vector<4x8x8xf32>
    %cst = arith.constant 9.99999995E+11 : f32
    %17 = vector.broadcast %cst : f32 to vector<4x8x8xf32>
    %18 = arith.select %3, %17, %16 : vector<4x8x8xi1>, vector<4x8x8xf32>
    %cst_14 = arith.constant 0.000000e+00 : f32
    %19 = vector.broadcast %cst_14 : f32 to vector<4x8x8xf32>
    %c0_i32 = arith.constant 0 : i32
    %cst_15 = arith.constant dense<0x7F800000> : vector<4x8xf32>
    %20 = vector.multi_reduction <minimumf>, %18, %cst_15 [2] : vector<4x8x8xf32> to vector<4x8xf32>
    %21 = vector.shape_cast %20 : vector<4x8xf32> to vector<4x8x1xf32>
    %22 = vector.broadcast %21 : vector<4x8x1xf32> to vector<4x8x8xf32>
    %23 = arith.cmpf oeq, %18, %22 : vector<4x8x8xf32>
    %c8_i32 = arith.constant 8 : i32
    %24 = vector.broadcast %c8_i32 : i32 to vector<4x8x8xi32>
    %25 = arith.select %23, %2, %24 : vector<4x8x8xi1>, vector<4x8x8xi32>
    %cst_16 = arith.constant dense<2147483647> : vector<4x8xi32>
    %26 = vector.multi_reduction <minsi>, %25, %cst_16 [2] : vector<4x8x8xi32> to vector<4x8xi32>
    %27 = vector.shape_cast %26 : vector<4x8xi32> to vector<4x8x1xi32>
    %28 = vector.broadcast %27 : vector<4x8x1xi32> to vector<4x8x8xi32>
    %29 = arith.cmpi eq, %2, %28 : vector<4x8x8xi32>
    %cst_17 = arith.constant 1.000000e+00 : f32
    %30 = vector.broadcast %cst_17 : f32 to vector<4x8x8xf32>
    %31 = arith.select %29, %30, %19 : vector<4x8x8xi1>, vector<4x8x8xf32>
    %cst_18 = arith.constant 9.99999995E+11 : f32
    %32 = vector.broadcast %cst_18 : f32 to vector<4x8x8xf32>
    %33 = arith.select %29, %32, %18 : vector<4x8x8xi1>, vector<4x8x8xf32>
    %c1_i32 = arith.constant 1 : i32
    %cst_19 = arith.constant dense<0x7F800000> : vector<4x8xf32>
    %34 = vector.multi_reduction <minimumf>, %33, %cst_19 [2] : vector<4x8x8xf32> to vector<4x8xf32>
    %35 = vector.shape_cast %34 : vector<4x8xf32> to vector<4x8x1xf32>
    %36 = vector.broadcast %35 : vector<4x8x1xf32> to vector<4x8x8xf32>
    %37 = arith.cmpf oeq, %33, %36 : vector<4x8x8xf32>
    %c8_i32_20 = arith.constant 8 : i32
    %38 = vector.broadcast %c8_i32_20 : i32 to vector<4x8x8xi32>
    %39 = arith.select %37, %2, %38 : vector<4x8x8xi1>, vector<4x8x8xi32>
    %cst_21 = arith.constant dense<2147483647> : vector<4x8xi32>
    %40 = vector.multi_reduction <minsi>, %39, %cst_21 [2] : vector<4x8x8xi32> to vector<4x8xi32>
    %41 = vector.shape_cast %40 : vector<4x8xi32> to vector<4x8x1xi32>
    %42 = vector.broadcast %41 : vector<4x8x1xi32> to vector<4x8x8xi32>
    %43 = arith.cmpi eq, %2, %42 : vector<4x8x8xi32>
    %cst_22 = arith.constant 1.000000e+00 : f32
    %44 = vector.broadcast %cst_22 : f32 to vector<4x8x8xf32>
    %45 = arith.select %43, %44, %31 : vector<4x8x8xi1>, vector<4x8x8xf32>
    %cst_23 = arith.constant 9.99999995E+11 : f32
    %46 = vector.broadcast %cst_23 : f32 to vector<4x8x8xf32>
    %47 = arith.select %43, %46, %33 : vector<4x8x8xi1>, vector<4x8x8xf32>
    %c2_i32 = arith.constant 2 : i32
    %cst_24 = arith.constant dense<0x7F800000> : vector<4x8xf32>
    %48 = vector.multi_reduction <minimumf>, %47, %cst_24 [2] : vector<4x8x8xf32> to vector<4x8xf32>
    %49 = vector.shape_cast %48 : vector<4x8xf32> to vector<4x8x1xf32>
    %50 = vector.broadcast %49 : vector<4x8x1xf32> to vector<4x8x8xf32>
    %51 = arith.cmpf oeq, %47, %50 : vector<4x8x8xf32>
    %c8_i32_25 = arith.constant 8 : i32
    %52 = vector.broadcast %c8_i32_25 : i32 to vector<4x8x8xi32>
    %53 = arith.select %51, %2, %52 : vector<4x8x8xi1>, vector<4x8x8xi32>
    %cst_26 = arith.constant dense<2147483647> : vector<4x8xi32>
    %54 = vector.multi_reduction <minsi>, %53, %cst_26 [2] : vector<4x8x8xi32> to vector<4x8xi32>
    %55 = vector.shape_cast %54 : vector<4x8xi32> to vector<4x8x1xi32>
    %56 = vector.broadcast %55 : vector<4x8x1xi32> to vector<4x8x8xi32>
    %57 = arith.cmpi eq, %2, %56 : vector<4x8x8xi32>
    %cst_27 = arith.constant 1.000000e+00 : f32
    %58 = vector.broadcast %cst_27 : f32 to vector<4x8x8xf32>
    %59 = arith.select %57, %58, %45 : vector<4x8x8xi1>, vector<4x8x8xf32>
    %cst_28 = arith.constant 9.99999995E+11 : f32
    %60 = vector.broadcast %cst_28 : f32 to vector<4x8x8xf32>
    %61 = arith.select %57, %60, %47 : vector<4x8x8xi1>, vector<4x8x8xf32>
    %cst_29 = arith.constant 0.000000e+00 : f32
    %62 = vector.broadcast %cst_29 : f32 to vector<4x8x8xf32>
    %63 = arith.select %3, %62, %59 : vector<4x8x8xi1>, vector<4x8x8xf32>
    %c0_30 = arith.constant 0 : index
    %c0_31 = arith.constant 0 : index
    %c0_32 = arith.constant 0 : index
    %64 = vector.load %arg6[%c0_30, %c0_31, %c0_32] : memref<4x1x8xf32, #tpu.memory_space<vmem>>, vector<4x1x8xf32>
    %cst_33 = arith.constant 0.000000e+00 : f32
    %65 = vector.broadcast %cst_33 : f32 to vector<4x1x8xf32>
    %66 = arith.cmpf one, %64, %65 : vector<4x1x8xf32>
    %cst_34 = arith.constant 0.000000e+00 : f32
    %67 = vector.shape_cast %66 : vector<4x1x8xi1> to vector<4x1x8xi1>
    %68 = vector.broadcast %67 : vector<4x1x8xi1> to vector<4x8x8xi1>
    %69 = vector.broadcast %cst_34 : f32 to vector<4x8x8xf32>
    %70 = arith.select %68, %63, %69 : vector<4x8x8xi1>, vector<4x8x8xf32>
    "tpu.trace_start"() <{level = 10 : i32, message = "bnh,bmh->bnm"}> : () -> ()
    %cst_35 = arith.constant dense<0.000000e+00> : vector<4x8x8xf32>
    %71 = tpu.matmul %0, %0, %cst_35 {dimension_numbers = #tpu.dot_dimension_numbers<[2], [2], [1], [1], [0, 0, 0, 1, 1, 1], [0], [0]>} : vector<4x8x32xf32>, vector<4x8x32xf32>, vector<4x8x8xf32> -> vector<4x8x8xf32>
    %cst_36 = arith.constant 0.000000e+00 : f32
    "tpu.trace_stop"() : () -> ()
    %72 = vector.broadcast %cst_36 : f32 to vector<4x8x8xf32>
    %73 = arith.cmpf one, %70, %72 : vector<4x8x8xf32>
    %cst_37 = arith.constant 0.000000e+00 : f32
    %74 = vector.broadcast %cst_37 : f32 to vector<4x8x8xf32>
    %75 = arith.select %73, %71, %74 : vector<4x8x8xi1>, vector<4x8x8xf32>
    %cst_38 = arith.constant dense<0xFF800000> : vector<4x8xf32>
    %76 = vector.multi_reduction <maximumf>, %75, %cst_38 [2] : vector<4x8x8xf32> to vector<4x8xf32>
    %77 = vector.shape_cast %76 : vector<4x8xf32> to vector<4x8x1xf32>
    %78 = vector.broadcast %77 : vector<4x8x1xf32> to vector<4x8x8xf32>
    %79 = arith.subf %75, %78 : vector<4x8x8xf32>
    %80 = math.exp %79 : vector<4x8x8xf32>
    %cst_39 = arith.constant dense<0.000000e+00> : vector<4x8xf32>
    %81 = vector.multi_reduction <add>, %80, %cst_39 [2] : vector<4x8x8xf32> to vector<4x8xf32>
    %82 = vector.shape_cast %81 : vector<4x8xf32> to vector<4x8x1xf32>
    %83 = vector.broadcast %82 : vector<4x8x1xf32> to vector<4x8x8xf32>
    %84 = arith.divf %80, %83 : vector<4x8x8xf32>
    "tpu.trace_start"() <{level = 10 : i32, message = "bnm,bmh->bnh"}> : () -> ()
    %cst_40 = arith.constant dense<0.000000e+00> : vector<4x8x32xf32>
    %85 = tpu.matmul %84, %0, %cst_40 {dimension_numbers = #tpu.dot_dimension_numbers<[2], [1], [1], [2], [0, 0, 0, 1, 1, 2], [0], [0]>} : vector<4x8x8xf32>, vector<4x8x32xf32>, vector<4x8x32xf32> -> vector<4x8x32xf32>
    "tpu.trace_stop"() : () -> ()
    %c0_41 = arith.constant 0 : index
    %c0_42 = arith.constant 0 : index
    %86 = vector.load %arg7[%c0_41, %c0_42] : memref<64x128xf32, #tpu.memory_space<vmem>>, vector<32x128xf32>
    %c32 = arith.constant 32 : index
    %c0_43 = arith.constant 0 : index
    %87 = vector.load %arg7[%c32, %c0_43] : memref<64x128xf32, #tpu.memory_space<vmem>>, vector<32x128xf32>
    %c0_44 = arith.constant 0 : index
    %c0_45 = arith.constant 0 : index
    %88 = vector.load %arg8[%c0_44, %c0_45] : memref<1x128xf32, #tpu.memory_space<vmem>>, vector<1x128xf32>
    %89 = vector.shape_cast %0 : vector<4x8x32xf32> to vector<32x32xf32>
    %90 = vector.shape_cast %85 : vector<4x8x32xf32> to vector<32x32xf32>
    %cst_46 = arith.constant dense<0.000000e+00> : vector<32x128xf32>
    %91 = tpu.matmul %89, %86, %cst_46 {dimension_numbers = #tpu.dot_dimension_numbers<[1], [0], [0], [1], [0, 0, 1, 1], [], []>} : vector<32x32xf32>, vector<32x128xf32>, vector<32x128xf32> -> vector<32x128xf32>
    %cst_47 = arith.constant dense<0.000000e+00> : vector<32x128xf32>
    %92 = tpu.matmul %90, %87, %cst_47 {dimension_numbers = #tpu.dot_dimension_numbers<[1], [0], [0], [1], [0, 0, 1, 1], [], []>} : vector<32x32xf32>, vector<32x128xf32>, vector<32x128xf32> -> vector<32x128xf32>
    %93 = arith.addf %91, %92 : vector<32x128xf32>
    %94 = vector.broadcast %88 : vector<1x128xf32> to vector<32x128xf32>
    %95 = arith.addf %93, %94 : vector<32x128xf32>
    %96 = vector.shape_cast %95 : vector<32x128xf32> to vector<4x8x128xf32>
    %c0_48 = arith.constant 0 : index
    %c0_49 = arith.constant 0 : index
    %c0_50 = arith.constant 0 : index
    %97 = vector.load %arg9[%c0_48, %c0_49, %c0_50] : memref<4x8x128xf32, #tpu.memory_space<vmem>>, vector<4x8x128xf32>
    tpu.vector_store %arg9[%c0_48, %c0_49, %c0_50], %96 {strides = array<i32>} : memref<4x8x128xf32, #tpu.memory_space<vmem>>, vector<4x8x128xf32>,
    return
  }
  func.func @transform_0(%arg0: i32) -> (i32, i32, i32) {
    %c0_i32 = arith.constant 0 : i32
    %c0_i32_0 = arith.constant 0 : i32
    %c0_i32_1 = arith.constant 0 : i32
    return %arg0, %c0_i32, %c0_i32_0 : i32, i32, i32
  }
  func.func @transform_1(%arg0: i32) -> (i32, i32, i32) {
    %c0_i32 = arith.constant 0 : i32
    %c0_i32_0 = arith.constant 0 : i32
    %c0_i32_1 = arith.constant 0 : i32
    return %arg0, %c0_i32, %c0_i32_0 : i32, i32, i32
  }
  func.func @transform_2(%arg0: i32) -> (i32, i32, i32) {
    %c0_i32 = arith.constant 0 : i32
    %c0_i32_0 = arith.constant 0 : i32
    %c0_i32_1 = arith.constant 0 : i32
    return %arg0, %c0_i32, %c0_i32_0 : i32, i32, i32
  }
  func.func @transform_3(%arg0: i32) -> (i32, i32, i32) {
    %c0_i32 = arith.constant 0 : i32
    %c0_i32_0 = arith.constant 0 : i32
    %c0_i32_1 = arith.constant 0 : i32
    return %arg0, %c0_i32, %c0_i32_0 : i32, i32, i32
  }
  func.func @transform_4(%arg0: i32) -> (i32, i32, i32) {
    %c0_i32 = arith.constant 0 : i32
    %c0_i32_0 = arith.constant 0 : i32
    %c0_i32_1 = arith.constant 0 : i32
    return %arg0, %c0_i32, %c0_i32_0 : i32, i32, i32
  }
  func.func @transform_5(%arg0: i32) -> (i32, i32, i32) {
    %c0_i32 = arith.constant 0 : i32
    %c0_i32_0 = arith.constant 0 : i32
    %c0_i32_1 = arith.constant 0 : i32
    return %arg0, %c0_i32, %c0_i32_0 : i32, i32, i32
  }
  func.func @transform_6(%arg0: i32) -> (i32, i32) {
    %c0_i32 = arith.constant 0 : i32
    %c0_i32_0 = arith.constant 0 : i32
    %c0_i32_1 = arith.constant 0 : i32
    return %c0_i32, %c0_i32_0 : i32, i32
  }
  func.func @transform_7(%arg0: i32) -> (i32, i32) {
    %c0_i32 = arith.constant 0 : i32
    %c0_i32_0 = arith.constant 0 : i32
    %c0_i32_1 = arith.constant 0 : i32
    return %c0_i32, %c0_i32_0 : i32, i32
  }
  func.func @transform_8(%arg0: i32) -> (i32, i32, i32) {
    %c0_i32 = arith.constant 0 : i32
    %c0_i32_0 = arith.constant 0 : i32
    %c0_i32_1 = arith.constant 0 : i32
    return %arg0, %c0_i32, %c0_i32_0 : i32, i32, i32
  }
}

</mosaic_0001>

<llo_original>
// kernel: tpu_custom_call.1
$region0: #{tpu_custom_call.1}
  #allocation0 [shape = 'u32[]', space=smem, size = 0x4, offset = 0x4, fixed_abs, tag = 'smem constant byte address 0x4 - core index']
  #allocation1 [shape = 'u32[144,128]{1,0:T(1,128)}', space=vmem, size = 0x12000, scoped, tag = 'internal scratch']
  %s0 = inlined_call_operand.vmem [shape: f32[8,8,32], index: 0, kind: input, shape index: {}]
  %s1 = inlined_call_operand.vmem [shape: f32[8,1,8], index: 1, kind: input, shape index: {}]
  %s2 = inlined_call_operand.vmem [shape: f32[8,8,1], index: 2, kind: input, shape index: {}]
  %s3 = inlined_call_operand.vmem [shape: f32[8,1,8], index: 3, kind: input, shape index: {}]
  %s4 = inlined_call_operand.vmem [shape: f32[8,8,1], index: 4, kind: input, shape index: {}]
  %s5 = inlined_call_operand.vmem [shape: f32[8,1,8], index: 5, kind: input, shape index: {}]
  %s6 = inlined_call_operand.vmem [shape: f32[64,128], index: 6, kind: input, shape index: {}]
  %s7 = inlined_call_operand.vmem [shape: f32[1,128], index: 7, kind: input, shape index: {}]
  %s8 = inlined_call_operand.hbm [shape: f32[8,8,128], index: 8, kind: output, shape index: {}]
  %s9 = sld [smem:[#allocation0]]
  $region65: #{tpu_custom_call.1} parent=0
    _
  %s11 = ssub.s32 1, %s9
  %s12 = scalar_select 0, %s11, %s9
  $region1: #{tpu_custom_call.1} parent=0
    #allocation2 [shape = 'u8[32768]{0}', space=vmem, size = 0x8000, scoped, tag = 'output window, operand 0']
    #allocation3 [shape = 's32[2]{0}', space=sflag, size = 0x8, scoped, tag = 'scoped memory for tpu_custom_call.1']
    %13 = vsyncpa [#allocation3], 0
    %s14 = scalar_lea.sflag [#allocation3], 1
    %15 = vsyncpa %s14, 0
    loop: start=0, step=1, limit=4
    $region2: #{tpu_custom_call.1} parent=1 // loop_pre_header
      _
    $region3: #{tpu_custom_call.1} parent=1 // loop_header
      %s17 = sphi 0, %s21
      %p18 = scmp.ge.s32.totalorder %s17, 4
      %s27 = sphi 0, %s29
      %s30 = sphi 0, %s27
      %s31 = sphi 0, %s30
      %s47 = sphi 0, %s31
      %s53 = sphi 0, %s55
      %s56 = sphi 0, %s53
      %s57 = sphi 0, %s56
      %s73 = sphi 0, %s57
      %s79 = sphi 0, %s81
      %s82 = sphi 0, %s79
      %s83 = sphi 0, %s82
      %s99 = sphi 0, %s83
      %s105 = sphi 0, %s107
      %s108 = sphi 0, %s105
      %s109 = sphi 0, %s108
      %s125 = sphi 0, %s109
      %s131 = sphi 0, %s133
      %s134 = sphi 0, %s131
      %s135 = sphi 0, %s134
      %s151 = sphi 0, %s135
      %s157 = sphi 0, %s159
      %s160 = sphi 0, %s157
      %s161 = sphi 0, %s160
      %s177 = sphi 0, %s161
      %s181 = sphi 0, %s181
      %s183 = sphi 0, %s181
      %s184 = sphi 0, %s183
      %s198 = sphi 0, %s184
      %s202 = sphi 0, %s202
      %s204 = sphi 0, %s202
      %s205 = sphi 0, %s204
      %s219 = sphi 0, %s205
      %s225 = sphi 0, %s227
      %s228 = sphi 0, %s225
      %s229 = sphi 0, %s228
      %s245 = sphi 0, %s229
    $region4: #{tpu_custom_call.1} parent=1 // loop_header_branch
      %20 = sbr.rel (%p18) target = $region8
    $region5: #{tpu_custom_call.1} parent=1 // loop_body
      %s22 = ssub.s32 %s17, 1
      %s23 = ssub.s32 %s17, 2
      %s24 = sadd.s32 %s17, 1
      %s25 = ssub.s32 %s17, %s24
      %p26 = scmp.eq.s32.totalorder %s25, 0
      %s28 = sadd.s32 %s27, 1
      %s29 = scalar_select %p26, %s27, %s28
      %p32 = pneg %p26
      %p33 = scmp.eq.s32.totalorder %s17, 1
      %p34 = por %p32, %p33
      %p35 = scmp.ne.s32.totalorder %s27, %s30
      %p36 = scmp.eq.s32.totalorder %s17, 0
      %p37 = por %p35, %p36
      %p38 = scmp.ne.s32.totalorder %s27, %s30
      %p39 = scmp.eq.s32.totalorder %s22, 1
      %p40 = por %p38, %p39
      %p41 = scmp.ne.s32.totalorder %s30, %s31
      %p42 = scmp.eq.s32.totalorder %s22, 0
      %p43 = por %p41, %p42
      %p44 = scmp.ne.s32.totalorder %s30, %s31
      %p45 = scmp.eq.s32.totalorder %s23, 1
      %p46 = por %p44, %p45
      %p48 = scmp.ne.s32.totalorder %s31, %s47
      %p49 = scmp.eq.s32.totalorder %s23, 0
      %p50 = por %p48, %p49
      %s51 = ssub.s32 %s17, %s24
      %p52 = scmp.eq.s32.totalorder %s51, 0
      %s54 = sadd.s32 %s53, 1
      %s55 = scalar_select %p52, %s53, %s54
      %p58 = pneg %p52
      %p59 = scmp.eq.s32.totalorder %s17, 1
      %p60 = por %p58, %p59
      %p61 = scmp.ne.s32.totalorder %s53, %s56
      %p62 = scmp.eq.s32.totalorder %s17, 0
      %p63 = por %p61, %p62
      %p64 = scmp.ne.s32.totalorder %s53, %s56
      %p65 = scmp.eq.s32.totalorder %s22, 1
      %p66 = por %p64, %p65
      %p67 = scmp.ne.s32.totalorder %s56, %s57
      %p68 = scmp.eq.s32.totalorder %s22, 0
      %p69 = por %p67, %p68
      %p70 = scmp.ne.s32.totalorder %s56, %s57
      %p71 = scmp.eq.s32.totalorder %s23, 1
      %p72 = por %p70, %p71
      %p74 = scmp.ne.s32.totalorder %s57, %s73
      %p75 = scmp.eq.s32.totalorder %s23, 0
      %p76 = por %p74, %p75
      %s77 = ssub.s32 %s17, %s24
      %p78 = scmp.eq.s32.totalorder %s77, 0
      %s80 = sadd.s32 %s79, 1
      %s81 = scalar_select %p78, %s79, %s80
      %p84 = pneg %p78
      %p85 = scmp.eq.s32.totalorder %s17, 1
      %p86 = por %p84, %p85
      %p87 = scmp.ne.s32.totalorder %s79, %s82
      %p88 = scmp.eq.s32.totalorder %s17, 0
      %p89 = por %p87, %p88
      %p90 = scmp.ne.s32.totalorder %s79, %s82
      %p91 = scmp.eq.s32.totalorder %s22, 1
      %p92 = por %p90, %p91
      %p93 = scmp.ne.s32.totalorder %s82, %s83
      %p94 = scmp.eq.s32.totalorder %s22, 0
      %p95 = por %p93, %p94
      %p96 = scmp.ne.s32.totalorder %s82, %s83
      %p97 = scmp.eq.s32.totalorder %s23, 1
      %p98 = por %p96, %p97
      %p100 = scmp.ne.s32.totalorder %s83, %s99
      %p101 = scmp.eq.s32.totalorder %s23, 0
      %p102 = por %p100, %p101
      %s103 = ssub.s32 %s17, %s24
      %p104 = scmp.eq.s32.totalorder %s103, 0
      %s106 = sadd.s32 %s105, 1
      %s107 = scalar_select %p104, %s105, %s106
      %p110 = pneg %p104
      %p111 = scmp.eq.s32.totalorder %s17, 1
      %p112 = por %p110, %p111
      %p113 = scmp.ne.s32.totalorder %s105, %s108
      %p114 = scmp.eq.s32.totalorder %s17, 0
      %p115 = por %p113, %p114
      %p116 = scmp.ne.s32.totalorder %s105, %s108
      %p117 = scmp.eq.s32.totalorder %s22, 1
      %p118 = por %p116, %p117
      %p119 = scmp.ne.s32.totalorder %s108, %s109
      %p120 = scmp.eq.s32.totalorder %s22, 0
      %p121 = por %p119, %p120
      %p122 = scmp.ne.s32.totalorder %s108, %s109
      %p123 = scmp.eq.s32.totalorder %s23, 1
      %p124 = por %p122, %p123
      %p126 = scmp.ne.s32.totalorder %s109, %s125
      %p127 = scmp.eq.s32.totalorder %s23, 0
      %p128 = por %p126, %p127
      %s129 = ssub.s32 %s17, %s24
      %p130 = scmp.eq.s32.totalorder %s129, 0
      %s132 = sadd.s32 %s131, 1
      %s133 = scalar_select %p130, %s131, %s132
      %p136 = pneg %p130
      %p137 = scmp.eq.s32.totalorder %s17, 1
      %p138 = por %p136, %p137
      %p139 = scmp.ne.s32.totalorder %s131, %s134
      %p140 = scmp.eq.s32.totalorder %s17, 0
      %p141 = por %p139, %p140
      %p142 = scmp.ne.s32.totalorder %s131, %s134
      %p143 = scmp.eq.s32.totalorder %s22, 1
      %p144 = por %p142, %p143
      %p145 = scmp.ne.s32.totalorder %s134, %s135
      %p146 = scmp.eq.s32.totalorder %s22, 0
      %p147 = por %p145, %p146
      %p148 = scmp.ne.s32.totalorder %s134, %s135
      %p149 = scmp.eq.s32.totalorder %s23, 1
      %p150 = por %p148, %p149
      %p152 = scmp.ne.s32.totalorder %s135, %s151
      %p153 = scmp.eq.s32.totalorder %s23, 0
      %p154 = por %p152, %p153
      %s155 = ssub.s32 %s17, %s24
      %p156 = scmp.eq.s32.totalorder %s155, 0
      %s158 = sadd.s32 %s157, 1
      %s159 = scalar_select %p156, %s157, %s158
      %p162 = pneg %p156
      %p163 = scmp.eq.s32.totalorder %s17, 1
      %p164 = por %p162, %p163
      %p165 = scmp.ne.s32.totalorder %s157, %s160
      %p166 = scmp.eq.s32.totalorder %s17, 0
      %p167 = por %p165, %p166
      %p168 = scmp.ne.s32.totalorder %s157, %s160
      %p169 = scmp.eq.s32.totalorder %s22, 1
      %p170 = por %p168, %p169
      %p171 = scmp.ne.s32.totalorder %s160, %s161
      %p172 = scmp.eq.s32.totalorder %s22, 0
      %p173 = por %p171, %p172
      %p174 = scmp.ne.s32.totalorder %s160, %s161
      %p175 = scmp.eq.s32.totalorder %s23, 1
      %p176 = por %p174, %p175
      %p178 = scmp.ne.s32.totalorder %s161, %s177
      %p179 = scmp.eq.s32.totalorder %s23, 0
      %p180 = por %p178, %p179
      %s182 = sadd.s32 %s181, 1
      %p185 = scmp.eq.s32.totalorder %s17, 1
      %p186 = scmp.ne.s32.totalorder %s181, %s183
      %p187 = scmp.eq.s32.totalorder %s17, 0
      %p188 = por %p186, %p187
      %p189 = scmp.ne.s32.totalorder %s181, %s183
      %p190 = scmp.eq.s32.totalorder %s22, 1
      %p191 = por %p189, %p190
      %p192 = scmp.ne.s32.totalorder %s183, %s184
      %p193 = scmp.eq.s32.totalorder %s22, 0
      %p194 = por %p192, %p193
      %p195 = scmp.ne.s32.totalorder %s183, %s184
      %p196 = scmp.eq.s32.totalorder %s23, 1
      %p197 = por %p195, %p196
      %p199 = scmp.ne.s32.totalorder %s184, %s198
      %p200 = scmp.eq.s32.totalorder %s23, 0
      %p201 = por %p199, %p200
      %s203 = sadd.s32 %s202, 1
      %p206 = scmp.eq.s32.totalorder %s17, 1
      %p207 = scmp.ne.s32.totalorder %s202, %s204
      %p208 = scmp.eq.s32.totalorder %s17, 0
      %p209 = por %p207, %p208
      %p210 = scmp.ne.s32.totalorder %s202, %s204
      %p211 = scmp.eq.s32.totalorder %s22, 1
      %p212 = por %p210, %p211
      %p213 = scmp.ne.s32.totalorder %s204, %s205
      %p214 = scmp.eq.s32.totalorder %s22, 0
      %p215 = por %p213, %p214
      %p216 = scmp.ne.s32.totalorder %s204, %s205
      %p217 = scmp.eq.s32.totalorder %s23, 1
      %p218 = por %p216, %p217
      %p220 = scmp.ne.s32.totalorder %s205, %s219
      %p221 = scmp.eq.s32.totalorder %s23, 0
      %p222 = por %p220, %p221
      %s223 = ssub.s32 %s17, %s24
      %p224 = scmp.eq.s32.totalorder %s223, 0
      %s226 = sadd.s32 %s225, 1
      %s227 = scalar_select %p224, %s225, %s226
      %p230 = pneg %p224
      %p231 = scmp.eq.s32.totalorder %s17, 1
      %p232 = por %p230, %p231
      %p233 = scmp.ne.s32.totalorder %s225, %s228
      %p234 = scmp.eq.s32.totalorder %s17, 0
      %p235 = por %p233, %p234
      %p236 = scmp.ne.s32.totalorder %s225, %s228
      %p237 = scmp.eq.s32.totalorder %s22, 1
      %p238 = por %p236, %p237
      %p239 = scmp.ne.s32.totalorder %s228, %s229
      %p240 = scmp.eq.s32.totalorder %s22, 0
      %p241 = por %p239, %p240
      %p242 = scmp.ne.s32.totalorder %s228, %s229
      %p243 = scmp.eq.s32.totalorder %s23, 1
      %p244 = por %p242, %p243
      %p246 = scmp.ne.s32.totalorder %s229, %s245
      %p247 = scmp.eq.s32.totalorder %s23, 0
      %p248 = por %p246, %p247
      %p249 = scmp.le.s32.totalorder 1, %s17
      %p250 = scmp.lt.s32.totalorder %s17, 3
      %p251 = pnand %p249, %p250
      %p252 = pneg %p251
      // Predicated region
      $region9: #{tpu_custom_call.1} parent=5 // pred_check
        _
      $region10: #{tpu_custom_call.1} parent=5 // pred_check_branch
        %254 = sbr.rel (%p251) target = $region12
      $region11: #{tpu_custom_call.1} parent=5 // pred_region
        %s255 = ssub.s32 %s17, 1
        // Predicated region
        $region13: #{tpu_custom_call.1} parent=11 // pred_check
          %p256 = pneg %p194
        $region14: #{tpu_custom_call.1} parent=11 // pred_check_branch
          %258 = sbr.rel (%p256) target = $region16
        $region15: #{tpu_custom_call.1} parent=11 // pred_region
          _
        $region16: #{tpu_custom_call.1} parent=11 // pred_fallthru
          _
        // Predicated region
        $region17: #{tpu_custom_call.1} parent=11 // pred_check
          %p259 = pneg %p215
        $region18: #{tpu_custom_call.1} parent=11 // pred_check_branch
          %261 = sbr.rel (%p259) target = $region20
        $region19: #{tpu_custom_call.1} parent=11 // pred_region
          _
        $region20: #{tpu_custom_call.1} parent=11 // pred_fallthru
          _
      $region12: #{tpu_custom_call.1} parent=5 // pred_fallthru
        _
      %p262 = scmp.lt.s32.totalorder %s17, 2
      // Predicated region
      $region21: #{tpu_custom_call.1} parent=5 // pred_check
        %p263 = pneg %p262
      $region22: #{tpu_custom_call.1} parent=5 // pred_check_branch
        %265 = sbr.rel (%p263) target = $region24
      $region23: #{tpu_custom_call.1} parent=5 // pred_region
        // Predicated region
        $region25: #{tpu_custom_call.1} parent=23 // pred_check
          %p266 = pneg %p37
        $region26: #{tpu_custom_call.1} parent=23 // pred_check_branch
          %268 = sbr.rel (%p266) target = $region28
        $region27: #{tpu_custom_call.1} parent=23 // pred_region
          %s269 = smul.u32 4, %s17
          %p270 = scmp.lt.s32.totalorder %s269, 7
          %s271 = scalar_select %p270, %s269, 7
          %s272 = smul.addr %s271, 8
          %s273 = scalar_lea.vmem %s0, %s272
          %s274 = smul.u32 4, %s17
        $region28: #{tpu_custom_call.1} parent=23 // pred_fallthru
          _
        // Predicated region
        $region29: #{tpu_custom_call.1} parent=23 // pred_check
          %p275 = pneg %p63
        $region30: #{tpu_custom_call.1} parent=23 // pred_check_branch
          %277 = sbr.rel (%p275) target = $region32
        $region31: #{tpu_custom_call.1} parent=23 // pred_region
          %s278 = smul.u32 4, %s17
          %p279 = scmp.lt.s32.totalorder %s278, 7
          %s280 = scalar_select %p279, %s278, 7
          %s281 = scalar_lea.vmem %s1, %s280
          %s282 = smul.u32 4, %s17
        $region32: #{tpu_custom_call.1} parent=23 // pred_fallthru
          _
        // Predicated region
        $region33: #{tpu_custom_call.1} parent=23 // pred_check
          %p283 = pneg %p89
        $region34: #{tpu_custom_call.1} parent=23 // pred_check_branch
          %285 = sbr.rel (%p283) target = $region36
        $region35: #{tpu_custom_call.1} parent=23 // pred_region
          %s286 = smul.u32 4, %s17
          %p287 = scmp.lt.s32.totalorder %s286, 7
          %s288 = scalar_select %p287, %s286, 7
          %s289 = smul.addr %s288, 8
          %s290 = scalar_lea.vmem %s2, %s289
          %s291 = smul.u32 4, %s17
        $region36: #{tpu_custom_call.1} parent=23 // pred_fallthru
          _
        // Predicated region
        $region37: #{tpu_custom_call.1} parent=23 // pred_check
          %p292 = pneg %p115
        $region38: #{tpu_custom_call.1} parent=23 // pred_check_branch
          %294 = sbr.rel (%p292) target = $region40
        $region39: #{tpu_custom_call.1} parent=23 // pred_region
          %s295 = smul.u32 4, %s17
          %p296 = scmp.lt.s32.totalorder %s295, 7
          %s297 = scalar_select %p296, %s295, 7
          %s298 = scalar_lea.vmem %s3, %s297
          %s299 = smul.u32 4, %s17
        $region40: #{tpu_custom_call.1} parent=23 // pred_fallthru
          _
        // Predicated region
        $region41: #{tpu_custom_call.1} parent=23 // pred_check
          %p300 = pneg %p141
        $region42: #{tpu_custom_call.1} parent=23 // pred_check_branch
          %302 = sbr.rel (%p300) target = $region44
        $region43: #{tpu_custom_call.1} parent=23 // pred_region
          %s303 = smul.u32 4, %s17
          %p304 = scmp.lt.s32.totalorder %s303, 7
          %s305 = scalar_select %p304, %s303, 7
          %s306 = smul.addr %s305, 8
          %s307 = scalar_lea.vmem %s4, %s306
          %s308 = smul.u32 4, %s17
        $region44: #{tpu_custom_call.1} parent=23 // pred_fallthru
          _
        // Predicated region
        $region45: #{tpu_custom_call.1} parent=23 // pred_check
          %p309 = pneg %p167
        $region46: #{tpu_custom_call.1} parent=23 // pred_check_branch
          %311 = sbr.rel (%p309) target = $region48
        $region47: #{tpu_custom_call.1} parent=23 // pred_region
          %s312 = smul.u32 4, %s17
          %p313 = scmp.lt.s32.totalorder %s312, 7
          %s314 = scalar_select %p313, %s312, 7
          %s315 = scalar_lea.vmem %s5, %s314
          %s316 = smul.u32 4, %s17
        $region48: #{tpu_custom_call.1} parent=23 // pred_fallthru
          _
      $region24: #{tpu_custom_call.1} parent=5 // pred_fallthru
        _
      %p317 = scmp.le.s32.totalorder 1, %s17
      %p318 = scmp.lt.s32.totalorder %s17, 3
      %p319 = pnand %p317, %p318
      %p320 = pneg %p319
      // Predicated region
      $region49: #{tpu_custom_call.1} parent=5 // pred_check
        _
      $region50: #{tpu_custom_call.1} parent=5 // pred_check_branch
        %322 = sbr.rel (%p319) target = $region52
      $region51: #{tpu_custom_call.1} parent=5 // pred_region
        %s323 = ssub.s32 %s17, 1
        %s324 = smul.u32 4, %s22
        %p325 = scmp.lt.s32.totalorder %s324, 7
        %s326 = scalar_select %p325, %s324, 7
        %s327 = smul.addr %s326, 8
        %s328 = scalar_lea.vmem %s0, %s327
        %p329 = pneg %p43
        %p330 = pneg %p40
        %s331 = smul.u32 4, %s22
        %p332 = scmp.lt.s32.totalorder %s331, 7
        %s333 = scalar_select %p332, %s331, 7
        %s334 = scalar_lea.vmem %s1, %s333
        %p335 = pneg %p69
        %p336 = pneg %p66
        %s337 = smul.u32 4, %s22
        %p338 = scmp.lt.s32.totalorder %s337, 7
        %s339 = scalar_select %p338, %s337, 7
        %s340 = smul.addr %s339, 8
        %s341 = scalar_lea.vmem %s2, %s340
        %p342 = pneg %p95
        %p343 = pneg %p92
        %s344 = smul.u32 4, %s22
        %p345 = scmp.lt.s32.totalorder %s344, 7
        %s346 = scalar_select %p345, %s344, 7
        %s347 = scalar_lea.vmem %s3, %s346
        %p348 = pneg %p121
        %p349 = pneg %p118
        %s350 = smul.u32 4, %s22
        %p351 = scmp.lt.s32.totalorder %s350, 7
        %s352 = scalar_select %p351, %s350, 7
        %s353 = smul.addr %s352, 8
        %s354 = scalar_lea.vmem %s4, %s353
        %p355 = pneg %p147
        %p356 = pneg %p144
        %s357 = smul.u32 4, %s22
        %p358 = scmp.lt.s32.totalorder %s357, 7
        %s359 = scalar_select %p358, %s357, 7
        %s360 = scalar_lea.vmem %s5, %s359
        %p361 = pneg %p173
        %p362 = pneg %p170
        %p363 = pneg %p194
        %p364 = pneg %p191
        %p365 = pneg %p215
        %p366 = pneg %p212
        %p367 = pneg %p241
        %p368 = pneg %p238
        %s369 = sand.u32 %s228, 1
        %s370 = scalar_lea.sflag [#allocation3], %s369
        %s371 = sand.u32 %s228, 1
        %s372 = smul.addr %s371, 32
        %s373 = scalar_lea.vmem [#allocation2], %s372
        %s374 = smul.u32 4, %s22
        %p375 = scmp.lt.s32.totalorder %s374, 7
        %s376 = scalar_select %p375, %s374, 7
        %s377 = smul.addr %s376, 8
        %s378 = scalar_lea.vmem %s0, %s377
        %s379 = smul.u32 4, %s22
        %s380 = smul.u32 4, %s22
        %p381 = scmp.lt.s32.totalorder %s380, 7
        %s382 = scalar_select %p381, %s380, 7
        %s383 = scalar_lea.vmem %s1, %s382
        %s384 = smul.u32 4, %s22
        %s385 = smul.u32 4, %s22
        %p386 = scmp.lt.s32.totalorder %s385, 7
        %s387 = scalar_select %p386, %s385, 7
        %s388 = smul.addr %s387, 8
        %s389 = scalar_lea.vmem %s2, %s388
        %s390 = smul.u32 4, %s22
        %s391 = smul.u32 4, %s22
        %p392 = scmp.lt.s32.totalorder %s391, 7
        %s393 = scalar_select %p392, %s391, 7
        %s394 = scalar_lea.vmem %s3, %s393
        %s395 = smul.u32 4, %s22
        %s396 = smul.u32 4, %s22
        %p397 = scmp.lt.s32.totalorder %s396, 7
        %s398 = scalar_select %p397, %s396, 7
        %s399 = smul.addr %s398, 8
        %s400 = scalar_lea.vmem %s4, %s399
        %s401 = smul.u32 4, %s22
        %s402 = smul.u32 4, %s22
        %p403 = scmp.lt.s32.totalorder %s402, 7
        %s404 = scalar_select %p403, %s402, 7
        %s405 = scalar_lea.vmem %s5, %s404
        %s406 = smul.u32 4, %s22
        %s407 = smul.u32 4, %s22
        %v408 = vld [vmem:[%s378] sm:$0xff]
        %v409 = vld [vmem:[%s378 + $0x8] sm:$0xff]
        %v410 = vld [vmem:[%s378 + $0x10] sm:$0xff]
        %v411 = vld [vmem:[%s378 + $0x18] sm:$0xff]
        %v412 = vlaneseq
        %v413 = vshrl.u32 %v412, 7
        %v414 = vlaneseq
        %v415 = vand.u32 %v414, 127
        %vm416 = vcmp.eq.s32.totalorder %v413, %v415
        %v417 = vld [vmem:[%s389] sm:$0xff]
        %v418 = vld [vmem:[%s389 + $0x8] sm:$0xff]
        %v419 = vld [vmem:[%s389 + $0x10] sm:$0xff]
        %v420 = vld [vmem:[%s389 + $0x18] sm:$0xff]
        %v421 = vld [vmem:[%s383] sm:$0x1]
        %v422 = vld [vmem:[%s383 + $0x1] sm:$0x1]
        %v423 = vld [vmem:[%s383 + $0x2] sm:$0x1]
        %v424 = vld [vmem:[%s383 + $0x3] sm:$0x1]
        %426 = vset.pattern.permute.xlu0 0
        %427 = vperm.xlu0 %426, %v417
        %v428 = vpop.permute.xlu0 %427
        %431 = vset.pattern.permute.xlu0 0
        %432 = vperm.xlu0 %431, %v418
        %v433 = vpop.permute.xlu0 %432
        %436 = vset.pattern.permute.xlu0 0
        %437 = vperm.xlu0 %436, %v419
        %v438 = vpop.permute.xlu0 %437
        %441 = vset.pattern.permute.xlu0 0
        %442 = vperm.xlu0 %441, %v420
        %v443 = vpop.permute.xlu0 %442
        %v449 = vlaneseq
        %v450 = vshrl.u32 %v449, 7
        %v451 = vsub.s32 0, %v450
        %v452 = vrot.slane %v421, %v451
        %v453 = vlaneseq
        %v454 = vshrl.u32 %v453, 7
        %v455 = vsub.s32 0, %v454
        %v456 = vrot.slane %v422, %v455
        %v457 = vlaneseq
        %v458 = vshrl.u32 %v457, 7
        %v459 = vsub.s32 0, %v458
        %v460 = vrot.slane %v423, %v459
        %v461 = vlaneseq
        %v462 = vshrl.u32 %v461, 7
        %v463 = vsub.s32 0, %v462
        %v464 = vrot.slane %v424, %v463
        %v469 = vsub.f32 %v428, %v452
        %v470 = vsub.f32 %v433, %v456
        %v471 = vsub.f32 %v438, %v460
        %v472 = vsub.f32 %v443, %v464
        %v473 = vld [vmem:[%s400] sm:$0xff]
        %v474 = vld [vmem:[%s400 + $0x8] sm:$0xff]
        %v475 = vld [vmem:[%s400 + $0x10] sm:$0xff]
        %v476 = vld [vmem:[%s400 + $0x18] sm:$0xff]
        %v477 = vld [vmem:[%s394] sm:$0x1]
        %v478 = vld [vmem:[%s394 + $0x1] sm:$0x1]
        %v479 = vld [vmem:[%s394 + $0x2] sm:$0x1]
        %v480 = vld [vmem:[%s394 + $0x3] sm:$0x1]
        %482 = vset.pattern.permute.xlu0 0
        %483 = vperm.xlu0 %482, %v473
        %v484 = vpop.permute.xlu0 %483
        %487 = vset.pattern.permute.xlu0 0
        %488 = vperm.xlu0 %487, %v474
        %v489 = vpop.permute.xlu0 %488
        %492 = vset.pattern.permute.xlu0 0
        %493 = vperm.xlu0 %492, %v475
        %v494 = vpop.permute.xlu0 %493
        %497 = vset.pattern.permute.xlu0 0
        %498 = vperm.xlu0 %497, %v476
        %v499 = vpop.permute.xlu0 %498
        %v505 = vlaneseq
        %v506 = vshrl.u32 %v505, 7
        %v507 = vsub.s32 0, %v506
        %v508 = vrot.slane %v477, %v507
        %v509 = vlaneseq
        %v510 = vshrl.u32 %v509, 7
        %v511 = vsub.s32 0, %v510
        %v512 = vrot.slane %v478, %v511
        %v513 = vlaneseq
        %v514 = vshrl.u32 %v513, 7
        %v515 = vsub.s32 0, %v514
        %v516 = vrot.slane %v479, %v515
        %v517 = vlaneseq
        %v518 = vshrl.u32 %v517, 7
        %v519 = vsub.s32 0, %v518
        %v520 = vrot.slane %v480, %v519
        %v525 = vsub.f32 %v484, %v508
        %v526 = vsub.f32 %v489, %v512
        %v527 = vsub.f32 %v494, %v516
        %v528 = vsub.f32 %v499, %v520
        %v529 = vmul.f32 %v469, %v469
        %v530 = vmul.f32 %v470, %v470
        %v531 = vmul.f32 %v471, %v471
        %v532 = vmul.f32 %v472, %v472
        %v533 = vmul.f32 %v525, %v525
        %v534 = vmul.f32 %v526, %v526
        %v535 = vmul.f32 %v527, %v527
        %v536 = vmul.f32 %v528, %v528
        %v537 = vadd.f32 %v529, %v533
        %v538 = vadd.f32 %v530, %v534
        %v539 = vadd.f32 %v531, %v535
        %v540 = vadd.f32 %v532, %v536
        %v541 = vsel %vm416, 1e+12, %v537
        %v542 = vsel %vm416, 1e+12, %v538
        %v543 = vsel %vm416, 1e+12, %v539
        %v544 = vsel %vm416, 1e+12, %v540
        %vm545 = vcmask 64512
        %v546 = vsel %vm545, %v541, inf
        %547 = vmin.xlane.f32.xlu0 %v546
        %v548 = vpop.xlane.xlu0 %547
        %v549 = vsel %vm545, %v542, inf
        %550 = vmin.xlane.f32.xlu0 %v549
        %v551 = vpop.xlane.xlu0 %550
        %v552 = vsel %vm545, %v543, inf
        %553 = vmin.xlane.f32.xlu0 %v552
        %v554 = vpop.xlane.xlu0 %553
        %v555 = vsel %vm545, %v544, inf
        %556 = vmin.xlane.f32.xlu0 %v555
        %v557 = vpop.xlane.xlu0 %556
        %vm558 = vcmp.eq.f32.partialorder %v541, %v548
        %vm559 = vcmp.eq.f32.partialorder %v542, %v551
        %vm560 = vcmp.eq.f32.partialorder %v543, %v554
        %vm561 = vcmp.eq.f32.partialorder %v544, %v557
        %v562 = vsel %vm558, %v415, 8
        %v563 = vsel %vm559, %v415, 8
        %v564 = vsel %vm560, %v415, 8
        %v565 = vsel %vm561, %v415, 8
        %v566 = vsel %vm545, %v562, 2147483647
        %v567 = vand.u32 %v566, 65535
        %v568 = vshra.s32 %v566, 16
        %v569 = vcvt.s32.f32 %v567
        %v570 = vcvt.s32.f32 %v568
        %571 = vmin.xlane.f32.xlu0 %v570
        %v572 = vpop.xlane.xlu0 %571
        %vm573 = vcmp.eq.f32.partialorder %v570, %v572
        %v574 = vsel %vm573, %v569, inf
        %575 = vmin.xlane.f32.xlu0 %v574
        %v576 = vpop.xlane.xlu0 %575
        %v577 = vcvt.f32.s32 %v576
        %v578 = vcvt.f32.s32 %v572
        %v579 = vshll.u32 %v578, 16
        %v580 = vadd.s32 %v579, %v577
        %v581 = vsel %vm545, %v563, 2147483647
        %v582 = vand.u32 %v581, 65535
        %v583 = vshra.s32 %v581, 16
        %v584 = vcvt.s32.f32 %v582
        %v585 = vcvt.s32.f32 %v583
        %586 = vmin.xlane.f32.xlu0 %v585
        %v587 = vpop.xlane.xlu0 %586
        %vm588 = vcmp.eq.f32.partialorder %v585, %v587
        %v589 = vsel %vm588, %v584, inf
        %590 = vmin.xlane.f32.xlu0 %v589
        %v591 = vpop.xlane.xlu0 %590
        %v592 = vcvt.f32.s32 %v591
        %v593 = vcvt.f32.s32 %v587
        %v594 = vshll.u32 %v593, 16
        %v595 = vadd.s32 %v594, %v592
        %v596 = vsel %vm545, %v564, 2147483647
        %v597 = vand.u32 %v596, 65535
        %v598 = vshra.s32 %v596, 16
        %v599 = vcvt.s32.f32 %v597
        %v600 = vcvt.s32.f32 %v598
        %601 = vmin.xlane.f32.xlu0 %v600
        %v602 = vpop.xlane.xlu0 %601
        %vm603 = vcmp.eq.f32.partialorder %v600, %v602
        %v604 = vsel %vm603, %v599, inf
        %605 = vmin.xlane.f32.xlu0 %v604
        %v606 = vpop.xlane.xlu0 %605
        %v607 = vcvt.f32.s32 %v606
        %v608 = vcvt.f32.s32 %v602
        %v609 = vshll.u32 %v608, 16
        %v610 = vadd.s32 %v609, %v607
        %v611 = vsel %vm545, %v565, 2147483647
        %v612 = vand.u32 %v611, 65535
        %v613 = vshra.s32 %v611, 16
        %v614 = vcvt.s32.f32 %v612
        %v615 = vcvt.s32.f32 %v613
        %616 = vmin.xlane.f32.xlu0 %v615
        %v617 = vpop.xlane.xlu0 %616
        %vm618 = vcmp.eq.f32.partialorder %v615, %v617
        %v619 = vsel %vm618, %v614, inf
        %620 = vmin.xlane.f32.xlu0 %v619
        %v621 = vpop.xlane.xlu0 %620
        %v622 = vcvt.f32.s32 %v621
        %v623 = vcvt.f32.s32 %v617
        %v624 = vshll.u32 %v623, 16
        %v625 = vadd.s32 %v624, %v622
        %vm626 = vcmp.eq.s32.totalorder %v415, %v580
        %vm627 = vcmp.eq.s32.totalorder %v415, %v595
        %vm628 = vcmp.eq.s32.totalorder %v415, %v610
        %vm629 = vcmp.eq.s32.totalorder %v415, %v625
        %v630 = vsel %vm626, 1.0, 0.0
        %v631 = vsel %vm627, 1.0, 0.0
        %v632 = vsel %vm628, 1.0, 0.0
        %v633 = vsel %vm629, 1.0, 0.0
        %v634 = vsel %vm626, 1e+12, %v541
        %v635 = vsel %vm627, 1e+12, %v542
        %v636 = vsel %vm628, 1e+12, %v543
        %v637 = vsel %vm629, 1e+12, %v544
        %v638 = vsel %vm545, %v634, inf
        %639 = vmin.xlane.f32.xlu0 %v638
        %v640 = vpop.xlane.xlu0 %639
        %v641 = vsel %vm545, %v635, inf
        %642 = vmin.xlane.f32.xlu0 %v641
        %v643 = vpop.xlane.xlu0 %642
        %v644 = vsel %vm545, %v636, inf
        %645 = vmin.xlane.f32.xlu0 %v644
        %v646 = vpop.xlane.xlu0 %645
        %v647 = vsel %vm545, %v637, inf
        %648 = vmin.xlane.f32.xlu0 %v647
        %v649 = vpop.xlane.xlu0 %648
        %vm650 = vcmp.eq.f32.partialorder %v634, %v640
        %vm651 = vcmp.eq.f32.partialorder %v635, %v643
        %vm652 = vcmp.eq.f32.partialorder %v636, %v646
        %vm653 = vcmp.eq.f32.partialorder %v637, %v649
        %v654 = vsel %vm650, %v415, 8
        %v655 = vsel %vm651, %v415, 8
        %v656 = vsel %vm652, %v415, 8
        %v657 = vsel %vm653, %v415, 8
        %v658 = vsel %vm545, %v654, 2147483647
        %v659 = vand.u32 %v658, 65535
        %v660 = vshra.s32 %v658, 16
        %v661 = vcvt.s32.f32 %v659
        %v662 = vcvt.s32.f32 %v660
        %663 = vmin.xlane.f32.xlu0 %v662
        %v664 = vpop.xlane.xlu0 %663
        %vm665 = vcmp.eq.f32.partialorder %v662, %v664
        %v666 = vsel %vm665, %v661, inf
        %667 = vmin.xlane.f32.xlu0 %v666
        %v668 = vpop.xlane.xlu0 %667
        %v669 = vcvt.f32.s32 %v668
        %v670 = vcvt.f32.s32 %v664
        %v671 = vshll.u32 %v670, 16
        %v672 = vadd.s32 %v671, %v669
        %v673 = vsel %vm545, %v655, 2147483647
        %v674 = vand.u32 %v673, 65535
        %v675 = vshra.s32 %v673, 16
        %v676 = vcvt.s32.f32 %v674
        %v677 = vcvt.s32.f32 %v675
        %678 = vmin.xlane.f32.xlu0 %v677
        %v679 = vpop.xlane.xlu0 %678
        %vm680 = vcmp.eq.f32.partialorder %v677, %v679
        %v681 = vsel %vm680, %v676, inf
        %682 = vmin.xlane.f32.xlu0 %v681
        %v683 = vpop.xlane.xlu0 %682
        %v684 = vcvt.f32.s32 %v683
        %v685 = vcvt.f32.s32 %v679
        %v686 = vshll.u32 %v685, 16
        %v687 = vadd.s32 %v686, %v684
        %v688 = vsel %vm545, %v656, 2147483647
        %v689 = vand.u32 %v688, 65535
        %v690 = vshra.s32 %v688, 16
        %v691 = vcvt.s32.f32 %v689
        %v692 = vcvt.s32.f32 %v690
        %693 = vmin.xlane.f32.xlu0 %v692
        %v694 = vpop.xlane.xlu0 %693
        %vm695 = vcmp.eq.f32.partialorder %v692, %v694
        %v696 = vsel %vm695, %v691, inf
        %697 = vmin.xlane.f32.xlu0 %v696
        %v698 = vpop.xlane.xlu0 %697
        %v699 = vcvt.f32.s32 %v698
        %v700 = vcvt.f32.s32 %v694
        %v701 = vshll.u32 %v700, 16
        %v702 = vadd.s32 %v701, %v699
        %v703 = vsel %vm545, %v657, 2147483647
        %v704 = vand.u32 %v703, 65535
        %v705 = vshra.s32 %v703, 16
        %v706 = vcvt.s32.f32 %v704
        %v707 = vcvt.s32.f32 %v705
        %708 = vmin.xlane.f32.xlu0 %v707
        %v709 = vpop.xlane.xlu0 %708
        %vm710 = vcmp.eq.f32.partialorder %v707, %v709
        %v711 = vsel %vm710, %v706, inf
        %712 = vmin.xlane.f32.xlu0 %v711
        %v713 = vpop.xlane.xlu0 %712
        %v714 = vcvt.f32.s32 %v713
        %v715 = vcvt.f32.s32 %v709
        %v716 = vshll.u32 %v715, 16
        %v717 = vadd.s32 %v716, %v714
        %vm718 = vcmp.eq.s32.totalorder %v415, %v672
        %vm719 = vcmp.eq.s32.totalorder %v415, %v687
        %vm720 = vcmp.eq.s32.totalorder %v415, %v702
        %vm721 = vcmp.eq.s32.totalorder %v415, %v717
        %v722 = vsel %vm718, 1.0, %v630
        %v723 = vsel %vm719, 1.0, %v631
        %v724 = vsel %vm720, 1.0, %v632
        %v725 = vsel %vm721, 1.0, %v633
        %v726 = vsel %vm718, 1e+12, %v634
        %v727 = vsel %vm719, 1e+12, %v635
        %v728 = vsel %vm720, 1e+12, %v636
        %v729 = vsel %vm721, 1e+12, %v637
        %v730 = vsel %vm545, %v726, inf
        %731 = vmin.xlane.f32.xlu0 %v730
        %v732 = vpop.xlane.xlu0 %731
        %v733 = vsel %vm545, %v727, inf
        %734 = vmin.xlane.f32.xlu0 %v733
        %v735 = vpop.xlane.xlu0 %734
        %v736 = vsel %vm545, %v728, inf
        %737 = vmin.xlane.f32.xlu0 %v736
        %v738 = vpop.xlane.xlu0 %737
        %v739 = vsel %vm545, %v729, inf
        %740 = vmin.xlane.f32.xlu0 %v739
        %v741 = vpop.xlane.xlu0 %740
        %vm742 = vcmp.eq.f32.partialorder %v726, %v732
        %vm743 = vcmp.eq.f32.partialorder %v727, %v735
        %vm744 = vcmp.eq.f32.partialorder %v728, %v738
        %vm745 = vcmp.eq.f32.partialorder %v729, %v741
        %v746 = vsel %vm742, %v415, 8
        %v747 = vsel %vm743, %v415, 8
        %v748 = vsel %vm744, %v415, 8
        %v749 = vsel %vm745, %v415, 8
        %v750 = vsel %vm545, %v746, 2147483647
        %v751 = vand.u32 %v750, 65535
        %v752 = vshra.s32 %v750, 16
        %v753 = vcvt.s32.f32 %v751
        %v754 = vcvt.s32.f32 %v752
        %755 = vmin.xlane.f32.xlu0 %v754
        %v756 = vpop.xlane.xlu0 %755
        %vm757 = vcmp.eq.f32.partialorder %v754, %v756
        %v758 = vsel %vm757, %v753, inf
        %759 = vmin.xlane.f32.xlu0 %v758
        %v760 = vpop.xlane.xlu0 %759
        %v761 = vcvt.f32.s32 %v760
        %v762 = vcvt.f32.s32 %v756
        %v763 = vshll.u32 %v762, 16
        %v764 = vadd.s32 %v763, %v761
        %v765 = vsel %vm545, %v747, 2147483647
        %v766 = vand.u32 %v765, 65535
        %v767 = vshra.s32 %v765, 16
        %v768 = vcvt.s32.f32 %v766
        %v769 = vcvt.s32.f32 %v767
        %770 = vmin.xlane.f32.xlu0 %v769
        %v771 = vpop.xlane.xlu0 %770
        %vm772 = vcmp.eq.f32.partialorder %v769, %v771
        %v773 = vsel %vm772, %v768, inf
        %774 = vmin.xlane.f32.xlu0 %v773
        %v775 = vpop.xlane.xlu0 %774
        %v776 = vcvt.f32.s32 %v775
        %v777 = vcvt.f32.s32 %v771
        %v778 = vshll.u32 %v777, 16
        %v779 = vadd.s32 %v778, %v776
        %v780 = vsel %vm545, %v748, 2147483647
        %v781 = vand.u32 %v780, 65535
        %v782 = vshra.s32 %v780, 16
        %v783 = vcvt.s32.f32 %v781
        %v784 = vcvt.s32.f32 %v782
        %785 = vmin.xlane.f32.xlu0 %v784
        %v786 = vpop.xlane.xlu0 %785
        %vm787 = vcmp.eq.f32.partialorder %v784, %v786
        %v788 = vsel %vm787, %v783, inf
        %789 = vmin.xlane.f32.xlu0 %v788
        %v790 = vpop.xlane.xlu0 %789
        %v791 = vcvt.f32.s32 %v790
        %v792 = vcvt.f32.s32 %v786
        %v793 = vshll.u32 %v792, 16
        %v794 = vadd.s32 %v793, %v791
        %v795 = vsel %vm545, %v749, 2147483647
        %v796 = vand.u32 %v795, 65535
        %v797 = vshra.s32 %v795, 16
        %v798 = vcvt.s32.f32 %v796
        %v799 = vcvt.s32.f32 %v797
        %800 = vmin.xlane.f32.xlu0 %v799
        %v801 = vpop.xlane.xlu0 %800
        %vm802 = vcmp.eq.f32.partialorder %v799, %v801
        %v803 = vsel %vm802, %v798, inf
        %804 = vmin.xlane.f32.xlu0 %v803
        %v805 = vpop.xlane.xlu0 %804
        %v806 = vcvt.f32.s32 %v805
        %v807 = vcvt.f32.s32 %v801
        %v808 = vshll.u32 %v807, 16
        %v809 = vadd.s32 %v808, %v806
        %vm810 = vcmp.eq.s32.totalorder %v415, %v764
        %vm811 = vcmp.eq.s32.totalorder %v415, %v779
        %vm812 = vcmp.eq.s32.totalorder %v415, %v794
        %vm813 = vcmp.eq.s32.totalorder %v415, %v809
        %v814 = vsel %vm810, 1.0, %v722
        %v815 = vsel %vm811, 1.0, %v723
        %v816 = vsel %vm812, 1.0, %v724
        %v817 = vsel %vm813, 1.0, %v725
        %v818 = vsel %vm416, 0.0, %v814
        %v819 = vsel %vm416, 0.0, %v815
        %v820 = vsel %vm416, 0.0, %v816
        %v821 = vsel %vm416, 0.0, %v817
        %v822 = vld [vmem:[%s405] sm:$0x1]
        %v823 = vld [vmem:[%s405 + $0x1] sm:$0x1]
        %v824 = vld [vmem:[%s405 + $0x2] sm:$0x1]
        %v825 = vld [vmem:[%s405 + $0x3] sm:$0x1]
        %vm826 = vcmp.ne.f32.partialorder %v822, 0.0
        %vm827 = vcmp.ne.f32.partialorder %v823, 0.0
        %vm828 = vcmp.ne.f32.partialorder %v824, 0.0
        %vm829 = vcmp.ne.f32.partialorder %v825, 0.0
        %v830 = vsel %vm826, 1, 0
        %v831 = vsel %vm827, 1, 0
        %v832 = vsel %vm828, 1, 0
        %v833 = vsel %vm829, 1, 0
        %v834 = vlaneseq
        %v835 = vshrl.u32 %v834, 7
        %v836 = vsub.s32 0, %v835
        %v837 = vrot.slane %v830, %v836
        %v838 = vlaneseq
        %v839 = vshrl.u32 %v838, 7
        %v840 = vsub.s32 0, %v839
        %v841 = vrot.slane %v831, %v840
        %v842 = vlaneseq
        %v843 = vshrl.u32 %v842, 7
        %v844 = vsub.s32 0, %v843
        %v845 = vrot.slane %v832, %v844
        %v846 = vlaneseq
        %v847 = vshrl.u32 %v846, 7
        %v848 = vsub.s32 0, %v847
        %v849 = vrot.slane %v833, %v848
        %vm850 = vcmp.eq.s32.totalorder %v837, 1
        %vm851 = vcmp.eq.s32.totalorder %v841, 1
        %vm852 = vcmp.eq.s32.totalorder %v845, 1
        %vm853 = vcmp.eq.s32.totalorder %v849, 1
        %v854 = vsel %vm850, %v818, 0.0
        %v855 = vsel %vm851, %v819, 0.0
        %v856 = vsel %vm852, %v820, 0.0
        %v857 = vsel %vm853, %v821, 0.0
        %vm858 = vcmask 261120
        %v860 = vsel %vm858, %v408, 0
        %862 = vmatprep.subr.mxu0 0.0
        %863 = vmatpush1.xpose.msra.mxu0 %v860
        %864 = vmatprep.subr.mxu0 0.0
        %865 = vmatpush1.xpose.msra.mxu0 0.0
        %866 = vmatprep.subr.mxu0 0.0
        %867 = vmatpush1.xpose.msra.mxu0 0.0
        %868 = vmatprep.subr.mxu0 0.0
        %869 = vmatpush1.xpose.msra.mxu0 0.0
        %870 = vmatprep.subr.mxu0 0.0
        %871 = vmatpush1.xpose.msra.mxu0 0.0
        %872 = vmatprep.subr.mxu0 0.0
        %873 = vmatpush1.xpose.msra.mxu0 0.0
        %874 = vmatprep.subr.mxu0 0.0
        %875 = vmatpush1.xpose.msra.mxu0 0.0
        %876 = vmatprep.subr.mxu0 0.0
        %877 = vmatpush1.xpose.msra.mxu0 0.0
        %878 = vmatprep.subr.mxu0 0.0
        %879 = vmatpush1.xpose.msra.mxu0 0.0
        %880 = vmatprep.subr.mxu0 0.0
        %881 = vmatpush1.xpose.msra.mxu0 0.0
        %882 = vmatprep.subr.mxu0 0.0
        %883 = vmatpush1.xpose.msra.mxu0 0.0
        %884 = vmatprep.subr.mxu0 0.0
        %885 = vmatpush1.xpose.msra.mxu0 0.0
        %886 = vmatprep.subr.mxu0 0.0
        %887 = vmatpush1.xpose.msra.mxu0 0.0
        %888 = vmatprep.subr.mxu0 0.0
        %889 = vmatpush1.xpose.msra.mxu0 0.0
        %890 = vmatprep.subr.mxu0 0.0
        %891 = vmatpush1.xpose.msra.mxu0 0.0
        %892 = vmatprep.subr.mxu0 0.0
        %893 = vmatpush1.xpose.msra.mxu0 0.0
        %894 = vmatprep.subr.mxu0 0.0
        %895 = vmatpush1.xpose.msra.mxu0 0.0
        %896 = vmatprep.subr.mxu0 0.0
        %897 = vmatpush1.xpose.msra.mxu0 0.0
        %898 = vmatprep.subr.mxu0 0.0
        %899 = vmatpush1.xpose.msra.mxu0 0.0
        %900 = vmatprep.subr.mxu0 0.0
        %901 = vmatpush1.xpose.msra.mxu0 0.0
        %902 = vmatprep.subr.mxu0 0.0
        %903 = vmatpush1.xpose.msra.mxu0 0.0
        %904 = vmatprep.subr.mxu0 0.0
        %905 = vmatpush1.xpose.msra.mxu0 0.0
        %906 = vmatprep.subr.mxu0 0.0
        %907 = vmatpush1.xpose.msra.mxu0 0.0
        %908 = vmatprep.subr.mxu0 0.0
        %909 = vmatpush1.xpose.msra.mxu0 0.0
        %910 = vmatprep.subr.mxu0 0.0
        %911 = vmatpush1.xpose.msra.mxu0 0.0
        %912 = vmatprep.subr.mxu0 0.0
        %913 = vmatpush1.xpose.msra.mxu0 0.0
        %914 = vmatprep.subr.mxu0 0.0
        %915 = vmatpush1.xpose.msra.mxu0 0.0
        %916 = vmatprep.subr.mxu0 0.0
        %917 = vmatpush1.xpose.msra.mxu0 0.0
        %918 = vmatprep.subr.mxu0 0.0
        %919 = vmatpush1.xpose.msra.mxu0 0.0
        %920 = vmatprep.subr.mxu0 0.0
        %921 = vmatpush1.xpose.msra.mxu0 0.0
        %922 = vmatprep.subr.mxu0 0.0
        %923 = vmatpush1.xpose.msra.mxu0 0.0
        %924 = vmatprep.subr.mxu0 0.0
        %925 = vmatpush1.xpose.msra.mxu0 0.0
        %926 = vmatprep.mubr.f32.mxu0 0.0
        %927 = vmatmul.mubr.f32.gmra.mrb[0].mxu0 %v860
        %v928 = vpop.f32.mrb[0].mxu0
        %v929 = vadd.f32 0.0, %v928
        %v930 = vpop.f32.mrb[0].mxu0
        %931 = vdwg.mxu0
        %v933 = vsel %vm858, %v409, 0
        %935 = vmatprep.subr.mxu0 0.0
        %936 = vmatpush1.xpose.msra.mxu0 %v933
        %937 = vmatprep.subr.mxu0 0.0
        %938 = vmatpush1.xpose.msra.mxu0 0.0
        %939 = vmatprep.subr.mxu0 0.0
        %940 = vmatpush1.xpose.msra.mxu0 0.0
        %941 = vmatprep.subr.mxu0 0.0
        %942 = vmatpush1.xpose.msra.mxu0 0.0
        %943 = vmatprep.subr.mxu0 0.0
        %944 = vmatpush1.xpose.msra.mxu0 0.0
        %945 = vmatprep.subr.mxu0 0.0
        %946 = vmatpush1.xpose.msra.mxu0 0.0
        %947 = vmatprep.subr.mxu0 0.0
        %948 = vmatpush1.xpose.msra.mxu0 0.0
        %949 = vmatprep.subr.mxu0 0.0
        %950 = vmatpush1.xpose.msra.mxu0 0.0
        %951 = vmatprep.subr.mxu0 0.0
        %952 = vmatpush1.xpose.msra.mxu0 0.0
        %953 = vmatprep.subr.mxu0 0.0
        %954 = vmatpush1.xpose.msra.mxu0 0.0
        %955 = vmatprep.subr.mxu0 0.0
        %956 = vmatpush1.xpose.msra.mxu0 0.0
        %957 = vmatprep.subr.mxu0 0.0
        %958 = vmatpush1.xpose.msra.mxu0 0.0
        %959 = vmatprep.subr.mxu0 0.0
        %960 = vmatpush1.xpose.msra.mxu0 0.0
        %961 = vmatprep.subr.mxu0 0.0
        %962 = vmatpush1.xpose.msra.mxu0 0.0
        %963 = vmatprep.subr.mxu0 0.0
        %964 = vmatpush1.xpose.msra.mxu0 0.0
        %965 = vmatprep.subr.mxu0 0.0
        %966 = vmatpush1.xpose.msra.mxu0 0.0
        %967 = vmatprep.subr.mxu0 0.0
        %968 = vmatpush1.xpose.msra.mxu0 0.0
        %969 = vmatprep.subr.mxu0 0.0
        %970 = vmatpush1.xpose.msra.mxu0 0.0
        %971 = vmatprep.subr.mxu0 0.0
        %972 = vmatpush1.xpose.msra.mxu0 0.0
        %973 = vmatprep.subr.mxu0 0.0
        %974 = vmatpush1.xpose.msra.mxu0 0.0
        %975 = vmatprep.subr.mxu0 0.0
        %976 = vmatpush1.xpose.msra.mxu0 0.0
        %977 = vmatprep.subr.mxu0 0.0
        %978 = vmatpush1.xpose.msra.mxu0 0.0
        %979 = vmatprep.subr.mxu0 0.0
        %980 = vmatpush1.xpose.msra.mxu0 0.0
        %981 = vmatprep.subr.mxu0 0.0
        %982 = vmatpush1.xpose.msra.mxu0 0.0
        %983 = vmatprep.subr.mxu0 0.0
        %984 = vmatpush1.xpose.msra.mxu0 0.0
        %985 = vmatprep.subr.mxu0 0.0
        %986 = vmatpush1.xpose.msra.mxu0 0.0
        %987 = vmatprep.subr.mxu0 0.0
        %988 = vmatpush1.xpose.msra.mxu0 0.0
        %989 = vmatprep.subr.mxu0 0.0
        %990 = vmatpush1.xpose.msra.mxu0 0.0
        %991 = vmatprep.subr.mxu0 0.0
        %992 = vmatpush1.xpose.msra.mxu0 0.0
        %993 = vmatprep.subr.mxu0 0.0
        %994 = vmatpush1.xpose.msra.mxu0 0.0
        %995 = vmatprep.subr.mxu0 0.0
        %996 = vmatpush1.xpose.msra.mxu0 0.0
        %997 = vmatprep.subr.mxu0 0.0
        %998 = vmatpush1.xpose.msra.mxu0 0.0
        %999 = vmatprep.mubr.f32.mxu0 0.0
        %1000 = vmatmul.mubr.f32.gmra.mrb[0].mxu0 %v933
        %v1001 = vpop.f32.mrb[0].mxu0
        %v1002 = vadd.f32 0.0, %v1001
        %v1003 = vpop.f32.mrb[0].mxu0
        %1004 = vdwg.mxu0
        %v1006 = vsel %vm858, %v410, 0
        %1008 = vmatprep.subr.mxu0 0.0
        %1009 = vmatpush1.xpose.msra.mxu0 %v1006
        %1010 = vmatprep.subr.mxu0 0.0
        %1011 = vmatpush1.xpose.msra.mxu0 0.0
        %1012 = vmatprep.subr.mxu0 0.0
        %1013 = vmatpush1.xpose.msra.mxu0 0.0
        %1014 = vmatprep.subr.mxu0 0.0
        %1015 = vmatpush1.xpose.msra.mxu0 0.0
        %1016 = vmatprep.subr.mxu0 0.0
        %1017 = vmatpush1.xpose.msra.mxu0 0.0
        %1018 = vmatprep.subr.mxu0 0.0
        %1019 = vmatpush1.xpose.msra.mxu0 0.0
        %1020 = vmatprep.subr.mxu0 0.0
        %1021 = vmatpush1.xpose.msra.mxu0 0.0
        %1022 = vmatprep.subr.mxu0 0.0
        %1023 = vmatpush1.xpose.msra.mxu0 0.0
        %1024 = vmatprep.subr.mxu0 0.0
        %1025 = vmatpush1.xpose.msra.mxu0 0.0
        %1026 = vmatprep.subr.mxu0 0.0
        %1027 = vmatpush1.xpose.msra.mxu0 0.0
        %1028 = vmatprep.subr.mxu0 0.0
        %1029 = vmatpush1.xpose.msra.mxu0 0.0
        %1030 = vmatprep.subr.mxu0 0.0
        %1031 = vmatpush1.xpose.msra.mxu0 0.0
        %1032 = vmatprep.subr.mxu0 0.0
        %1033 = vmatpush1.xpose.msra.mxu0 0.0
        %1034 = vmatprep.subr.mxu0 0.0
        %1035 = vmatpush1.xpose.msra.mxu0 0.0
        %1036 = vmatprep.subr.mxu0 0.0
        %1037 = vmatpush1.xpose.msra.mxu0 0.0
        %1038 = vmatprep.subr.mxu0 0.0
        %1039 = vmatpush1.xpose.msra.mxu0 0.0
        %1040 = vmatprep.subr.mxu0 0.0
        %1041 = vmatpush1.xpose.msra.mxu0 0.0
        %1042 = vmatprep.subr.mxu0 0.0
        %1043 = vmatpush1.xpose.msra.mxu0 0.0
        %1044 = vmatprep.subr.mxu0 0.0
        %1045 = vmatpush1.xpose.msra.mxu0 0.0
        %1046 = vmatprep.subr.mxu0 0.0
        %1047 = vmatpush1.xpose.msra.mxu0 0.0
        %1048 = vmatprep.subr.mxu0 0.0
        %1049 = vmatpush1.xpose.msra.mxu0 0.0
        %1050 = vmatprep.subr.mxu0 0.0
        %1051 = vmatpush1.xpose.msra.mxu0 0.0
        %1052 = vmatprep.subr.mxu0 0.0
        %1053 = vmatpush1.xpose.msra.mxu0 0.0
        %1054 = vmatprep.subr.mxu0 0.0
        %1055 = vmatpush1.xpose.msra.mxu0 0.0
        %1056 = vmatprep.subr.mxu0 0.0
        %1057 = vmatpush1.xpose.msra.mxu0 0.0
        %1058 = vmatprep.subr.mxu0 0.0
        %1059 = vmatpush1.xpose.msra.mxu0 0.0
        %1060 = vmatprep.subr.mxu0 0.0
        %1061 = vmatpush1.xpose.msra.mxu0 0.0
        %1062 = vmatprep.subr.mxu0 0.0
        %1063 = vmatpush1.xpose.msra.mxu0 0.0
        %1064 = vmatprep.subr.mxu0 0.0
        %1065 = vmatpush1.xpose.msra.mxu0 0.0
        %1066 = vmatprep.subr.mxu0 0.0
        %1067 = vmatpush1.xpose.msra.mxu0 0.0
        %1068 = vmatprep.subr.mxu0 0.0
        %1069 = vmatpush1.xpose.msra.mxu0 0.0
        %1070 = vmatprep.subr.mxu0 0.0
        %1071 = vmatpush1.xpose.msra.mxu0 0.0
        %1072 = vmatprep.mubr.f32.mxu0 0.0
        %1073 = vmatmul.mubr.f32.gmra.mrb[0].mxu0 %v1006
        %v1074 = vpop.f32.mrb[0].mxu0
        %v1075 = vadd.f32 0.0, %v1074
        %v1076 = vpop.f32.mrb[0].mxu0
        %1077 = vdwg.mxu0
        %v1079 = vsel %vm858, %v411, 0
        %1081 = vmatprep.subr.mxu0 0.0
        %1082 = vmatpush1.xpose.msra.mxu0 %v1079
        %1083 = vmatprep.subr.mxu0 0.0
        %1084 = vmatpush1.xpose.msra.mxu0 0.0
        %1085 = vmatprep.subr.mxu0 0.0
        %1086 = vmatpush1.xpose.msra.mxu0 0.0
        %1087 = vmatprep.subr.mxu0 0.0
        %1088 = vmatpush1.xpose.msra.mxu0 0.0
        %1089 = vmatprep.subr.mxu0 0.0
        %1090 = vmatpush1.xpose.msra.mxu0 0.0
        %1091 = vmatprep.subr.mxu0 0.0
        %1092 = vmatpush1.xpose.msra.mxu0 0.0
        %1093 = vmatprep.subr.mxu0 0.0
        %1094 = vmatpush1.xpose.msra.mxu0 0.0
        %1095 = vmatprep.subr.mxu0 0.0
        %1096 = vmatpush1.xpose.msra.mxu0 0.0
        %1097 = vmatprep.subr.mxu0 0.0
        %1098 = vmatpush1.xpose.msra.mxu0 0.0
        %1099 = vmatprep.subr.mxu0 0.0
        %1100 = vmatpush1.xpose.msra.mxu0 0.0
        %1101 = vmatprep.subr.mxu0 0.0
        %1102 = vmatpush1.xpose.msra.mxu0 0.0
        %1103 = vmatprep.subr.mxu0 0.0
        %1104 = vmatpush1.xpose.msra.mxu0 0.0
        %1105 = vmatprep.subr.mxu0 0.0
        %1106 = vmatpush1.xpose.msra.mxu0 0.0
        %1107 = vmatprep.subr.mxu0 0.0
        %1108 = vmatpush1.xpose.msra.mxu0 0.0
        %1109 = vmatprep.subr.mxu0 0.0
        %1110 = vmatpush1.xpose.msra.mxu0 0.0
        %1111 = vmatprep.subr.mxu0 0.0
        %1112 = vmatpush1.xpose.msra.mxu0 0.0
        %1113 = vmatprep.subr.mxu0 0.0
        %1114 = vmatpush1.xpose.msra.mxu0 0.0
        %1115 = vmatprep.subr.mxu0 0.0
        %1116 = vmatpush1.xpose.msra.mxu0 0.0
        %1117 = vmatprep.subr.mxu0 0.0
        %1118 = vmatpush1.xpose.msra.mxu0 0.0
        %1119 = vmatprep.subr.mxu0 0.0
        %1120 = vmatpush1.xpose.msra.mxu0 0.0
        %1121 = vmatprep.subr.mxu0 0.0
        %1122 = vmatpush1.xpose.msra.mxu0 0.0
        %1123 = vmatprep.subr.mxu0 0.0
        %1124 = vmatpush1.xpose.msra.mxu0 0.0
        %1125 = vmatprep.subr.mxu0 0.0
        %1126 = vmatpush1.xpose.msra.mxu0 0.0
        %1127 = vmatprep.subr.mxu0 0.0
        %1128 = vmatpush1.xpose.msra.mxu0 0.0
        %1129 = vmatprep.subr.mxu0 0.0
        %1130 = vmatpush1.xpose.msra.mxu0 0.0
        %1131 = vmatprep.subr.mxu0 0.0
        %1132 = vmatpush1.xpose.msra.mxu0 0.0
        %1133 = vmatprep.subr.mxu0 0.0
        %1134 = vmatpush1.xpose.msra.mxu0 0.0
        %1135 = vmatprep.subr.mxu0 0.0
        %1136 = vmatpush1.xpose.msra.mxu0 0.0
        %1137 = vmatprep.subr.mxu0 0.0
        %1138 = vmatpush1.xpose.msra.mxu0 0.0
        %1139 = vmatprep.subr.mxu0 0.0
        %1140 = vmatpush1.xpose.msra.mxu0 0.0
        %1141 = vmatprep.subr.mxu0 0.0
        %1142 = vmatpush1.xpose.msra.mxu0 0.0
        %1143 = vmatprep.subr.mxu0 0.0
        %1144 = vmatpush1.xpose.msra.mxu0 0.0
        %1145 = vmatprep.mubr.f32.mxu0 0.0
        %1146 = vmatmul.mubr.f32.gmra.mrb[0].mxu0 %v1079
        %v1147 = vpop.f32.mrb[0].mxu0
        %v1148 = vadd.f32 0.0, %v1147
        %v1149 = vpop.f32.mrb[0].mxu0
        %1150 = vdwg.mxu0
        %vm1151 = vcmp.ne.f32.partialorder %v854, 0.0
        %vm1152 = vcmp.ne.f32.partialorder %v855, 0.0
        %vm1153 = vcmp.ne.f32.partialorder %v856, 0.0
        %vm1154 = vcmp.ne.f32.partialorder %v857, 0.0
        %v1155 = vsel %vm1151, %v929, 0.0
        %v1156 = vsel %vm1152, %v1002, 0.0
        %v1157 = vsel %vm1153, %v1075, 0.0
        %v1158 = vsel %vm1154, %v1148, 0.0
        %v1159 = vsel %vm545, %v1155, -inf
        %1160 = vmax.xlane.f32.xlu0 %v1159
        %v1161 = vpop.xlane.xlu0 %1160
        %v1162 = vsel %vm545, %v1156, -inf
        %1163 = vmax.xlane.f32.xlu0 %v1162
        %v1164 = vpop.xlane.xlu0 %1163
        %v1165 = vsel %vm545, %v1157, -inf
        %1166 = vmax.xlane.f32.xlu0 %v1165
        %v1167 = vpop.xlane.xlu0 %1166
        %v1168 = vsel %vm545, %v1158, -inf
        %1169 = vmax.xlane.f32.xlu0 %v1168
        %v1170 = vpop.xlane.xlu0 %1169
        %v1171 = vsub.f32 %v1155, %v1161
        %v1172 = vsub.f32 %v1156, %v1164
        %v1173 = vsub.f32 %v1157, %v1167
        %v1174 = vsub.f32 %v1158, %v1170
        %v1175 = vmul.f32 %v1171, 1.442695
        %v1176 = vpow.pop %v1175
        %v1177 = vmul.f32 %v1172, 1.442695
        %v1178 = vpow.pop %v1177
        %v1179 = vmul.f32 %v1173, 1.442695
        %v1180 = vpow.pop %v1179
        %v1181 = vmul.f32 %v1174, 1.442695
        %v1182 = vpow.pop %v1181
        %v1183 = vsel %vm545, %v1176, 0.0
        %1184 = vadd.xlane.f32.xlu0 %v1183
        %v1185 = vpop.xlane.xlu0 %1184
        %v1186 = vsel %vm545, %v1178, 0.0
        %1187 = vadd.xlane.f32.xlu0 %v1186
        %v1188 = vpop.xlane.xlu0 %1187
        %v1189 = vsel %vm545, %v1180, 0.0
        %1190 = vadd.xlane.f32.xlu0 %v1189
        %v1191 = vpop.xlane.xlu0 %1190
        %v1192 = vsel %vm545, %v1182, 0.0
        %1193 = vadd.xlane.f32.xlu0 %v1192
        %v1194 = vpop.xlane.xlu0 %1193
        %v1195 = vrcp.pop %v1185
        %v1196 = vmul.f32 %v1176, %v1195
        %v1197 = vrcp.pop %v1188
        %v1198 = vmul.f32 %v1178, %v1197
        %v1199 = vrcp.pop %v1191
        %v1200 = vmul.f32 %v1180, %v1199
        %v1201 = vrcp.pop %v1194
        %v1202 = vmul.f32 %v1182, %v1201
        %v1204 = vsel %vm545, %v1196, 0
        %1206 = vmatprep.subr.mxu0 0.0
        %1207 = vmatpush1.msra.mxu0 %v408
        %1208 = vmatprep.subr.mxu0 0.0
        %1209 = vmatpush1.msra.mxu0 0.0
        %1210 = vmatprep.subr.mxu0 0.0
        %1211 = vmatpush1.msra.mxu0 0.0
        %1212 = vmatprep.subr.mxu0 0.0
        %1213 = vmatpush1.msra.mxu0 0.0
        %1214 = vmatprep.subr.mxu0 0.0
        %1215 = vmatpush1.msra.mxu0 0.0
        %1216 = vmatprep.subr.mxu0 0.0
        %1217 = vmatpush1.msra.mxu0 0.0
        %1218 = vmatprep.subr.mxu0 0.0
        %1219 = vmatpush1.msra.mxu0 0.0
        %1220 = vmatprep.subr.mxu0 0.0
        %1221 = vmatpush1.msra.mxu0 0.0
        %1222 = vmatprep.subr.mxu0 0.0
        %1223 = vmatpush1.msra.mxu0 0.0
        %1224 = vmatprep.subr.mxu0 0.0
        %1225 = vmatpush1.msra.mxu0 0.0
        %1226 = vmatprep.subr.mxu0 0.0
        %1227 = vmatpush1.msra.mxu0 0.0
        %1228 = vmatprep.subr.mxu0 0.0
        %1229 = vmatpush1.msra.mxu0 0.0
        %1230 = vmatprep.subr.mxu0 0.0
        %1231 = vmatpush1.msra.mxu0 0.0
        %1232 = vmatprep.subr.mxu0 0.0
        %1233 = vmatpush1.msra.mxu0 0.0
        %1234 = vmatprep.subr.mxu0 0.0
        %1235 = vmatpush1.msra.mxu0 0.0
        %1236 = vmatprep.subr.mxu0 0.0
        %1237 = vmatpush1.msra.mxu0 0.0
        %1238 = vmatprep.subr.mxu0 0.0
        %1239 = vmatpush1.msra.mxu0 0.0
        %1240 = vmatprep.subr.mxu0 0.0
        %1241 = vmatpush1.msra.mxu0 0.0
        %1242 = vmatprep.subr.mxu0 0.0
        %1243 = vmatpush1.msra.mxu0 0.0
        %1244 = vmatprep.subr.mxu0 0.0
        %1245 = vmatpush1.msra.mxu0 0.0
        %1246 = vmatprep.subr.mxu0 0.0
        %1247 = vmatpush1.msra.mxu0 0.0
        %1248 = vmatprep.subr.mxu0 0.0
        %1249 = vmatpush1.msra.mxu0 0.0
        %1250 = vmatprep.subr.mxu0 0.0
        %1251 = vmatpush1.msra.mxu0 0.0
        %1252 = vmatprep.subr.mxu0 0.0
        %1253 = vmatpush1.msra.mxu0 0.0
        %1254 = vmatprep.subr.mxu0 0.0
        %1255 = vmatpush1.msra.mxu0 0.0
        %1256 = vmatprep.subr.mxu0 0.0
        %1257 = vmatpush1.msra.mxu0 0.0
        %1258 = vmatprep.subr.mxu0 0.0
        %1259 = vmatpush1.msra.mxu0 0.0
        %1260 = vmatprep.subr.mxu0 0.0
        %1261 = vmatpush1.msra.mxu0 0.0
        %1262 = vmatprep.subr.mxu0 0.0
        %1263 = vmatpush1.msra.mxu0 0.0
        %1264 = vmatprep.subr.mxu0 0.0
        %1265 = vmatpush1.msra.mxu0 0.0
        %1266 = vmatprep.subr.mxu0 0.0
        %1267 = vmatpush1.msra.mxu0 0.0
        %1268 = vmatprep.subr.mxu0 0.0
        %1269 = vmatpush1.msra.mxu0 0.0
        %1270 = vmatprep.mubr.f32.mxu0 0.0
        %1271 = vmatmul.mubr.f32.gmra.mrb[0].mxu0 %v1204
        %v1272 = vpop.f32.mrb[0].mxu0
        %v1273 = vadd.f32 0.0, %v1272
        %v1274 = vpop.f32.mrb[0].mxu0
        %1275 = vdwg.mxu0
        %v1277 = vsel %vm545, %v1198, 0
        %1279 = vmatprep.subr.mxu0 0.0
        %1280 = vmatpush1.msra.mxu0 %v409
        %1281 = vmatprep.subr.mxu0 0.0
        %1282 = vmatpush1.msra.mxu0 0.0
        %1283 = vmatprep.subr.mxu0 0.0
        %1284 = vmatpush1.msra.mxu0 0.0
        %1285 = vmatprep.subr.mxu0 0.0
        %1286 = vmatpush1.msra.mxu0 0.0
        %1287 = vmatprep.subr.mxu0 0.0
        %1288 = vmatpush1.msra.mxu0 0.0
        %1289 = vmatprep.subr.mxu0 0.0
        %1290 = vmatpush1.msra.mxu0 0.0
        %1291 = vmatprep.subr.mxu0 0.0
        %1292 = vmatpush1.msra.mxu0 0.0
        %1293 = vmatprep.subr.mxu0 0.0
        %1294 = vmatpush1.msra.mxu0 0.0
        %1295 = vmatprep.subr.mxu0 0.0
        %1296 = vmatpush1.msra.mxu0 0.0
        %1297 = vmatprep.subr.mxu0 0.0
        %1298 = vmatpush1.msra.mxu0 0.0
        %1299 = vmatprep.subr.mxu0 0.0
        %1300 = vmatpush1.msra.mxu0 0.0
        %1301 = vmatprep.subr.mxu0 0.0
        %1302 = vmatpush1.msra.mxu0 0.0
        %1303 = vmatprep.subr.mxu0 0.0
        %1304 = vmatpush1.msra.mxu0 0.0
        %1305 = vmatprep.subr.mxu0 0.0
        %1306 = vmatpush1.msra.mxu0 0.0
        %1307 = vmatprep.subr.mxu0 0.0
        %1308 = vmatpush1.msra.mxu0 0.0
        %1309 = vmatprep.subr.mxu0 0.0
        %1310 = vmatpush1.msra.mxu0 0.0
        %1311 = vmatprep.subr.mxu0 0.0
        %1312 = vmatpush1.msra.mxu0 0.0
        %1313 = vmatprep.subr.mxu0 0.0
        %1314 = vmatpush1.msra.mxu0 0.0
        %1315 = vmatprep.subr.mxu0 0.0
        %1316 = vmatpush1.msra.mxu0 0.0
        %1317 = vmatprep.subr.mxu0 0.0
        %1318 = vmatpush1.msra.mxu0 0.0
        %1319 = vmatprep.subr.mxu0 0.0
        %1320 = vmatpush1.msra.mxu0 0.0
        %1321 = vmatprep.subr.mxu0 0.0
        %1322 = vmatpush1.msra.mxu0 0.0
        %1323 = vmatprep.subr.mxu0 0.0
        %1324 = vmatpush1.msra.mxu0 0.0
        %1325 = vmatprep.subr.mxu0 0.0
        %1326 = vmatpush1.msra.mxu0 0.0
        %1327 = vmatprep.subr.mxu0 0.0
        %1328 = vmatpush1.msra.mxu0 0.0
        %1329 = vmatprep.subr.mxu0 0.0
        %1330 = vmatpush1.msra.mxu0 0.0
        %1331 = vmatprep.subr.mxu0 0.0
        %1332 = vmatpush1.msra.mxu0 0.0
        %1333 = vmatprep.subr.mxu0 0.0
        %1334 = vmatpush1.msra.mxu0 0.0
        %1335 = vmatprep.subr.mxu0 0.0
        %1336 = vmatpush1.msra.mxu0 0.0
        %1337 = vmatprep.subr.mxu0 0.0
        %1338 = vmatpush1.msra.mxu0 0.0
        %1339 = vmatprep.subr.mxu0 0.0
        %1340 = vmatpush1.msra.mxu0 0.0
        %1341 = vmatprep.subr.mxu0 0.0
        %1342 = vmatpush1.msra.mxu0 0.0
        %1343 = vmatprep.mubr.f32.mxu0 0.0
        %1344 = vmatmul.mubr.f32.gmra.mrb[0].mxu0 %v1277
        %v1345 = vpop.f32.mrb[0].mxu0
        %v1346 = vadd.f32 0.0, %v1345
        %v1347 = vpop.f32.mrb[0].mxu0
        %1348 = vdwg.mxu0
        %v1350 = vsel %vm545, %v1200, 0
        %1352 = vmatprep.subr.mxu0 0.0
        %1353 = vmatpush1.msra.mxu0 %v410
        %1354 = vmatprep.subr.mxu0 0.0
        %1355 = vmatpush1.msra.mxu0 0.0
        %1356 = vmatprep.subr.mxu0 0.0
        %1357 = vmatpush1.msra.mxu0 0.0
        %1358 = vmatprep.subr.mxu0 0.0
        %1359 = vmatpush1.msra.mxu0 0.0
        %1360 = vmatprep.subr.mxu0 0.0
        %1361 = vmatpush1.msra.mxu0 0.0
        %1362 = vmatprep.subr.mxu0 0.0
        %1363 = vmatpush1.msra.mxu0 0.0
        %1364 = vmatprep.subr.mxu0 0.0
        %1365 = vmatpush1.msra.mxu0 0.0
        %1366 = vmatprep.subr.mxu0 0.0
        %1367 = vmatpush1.msra.mxu0 0.0
        %1368 = vmatprep.subr.mxu0 0.0
        %1369 = vmatpush1.msra.mxu0 0.0
        %1370 = vmatprep.subr.mxu0 0.0
        %1371 = vmatpush1.msra.mxu0 0.0
        %1372 = vmatprep.subr.mxu0 0.0
        %1373 = vmatpush1.msra.mxu0 0.0
        %1374 = vmatprep.subr.mxu0 0.0
        %1375 = vmatpush1.msra.mxu0 0.0
        %1376 = vmatprep.subr.mxu0 0.0
        %1377 = vmatpush1.msra.mxu0 0.0
        %1378 = vmatprep.subr.mxu0 0.0
        %1379 = vmatpush1.msra.mxu0 0.0
        %1380 = vmatprep.subr.mxu0 0.0
        %1381 = vmatpush1.msra.mxu0 0.0
        %1382 = vmatprep.subr.mxu0 0.0
        %1383 = vmatpush1.msra.mxu0 0.0
        %1384 = vmatprep.subr.mxu0 0.0
        %1385 = vmatpush1.msra.mxu0 0.0
        %1386 = vmatprep.subr.mxu0 0.0
        %1387 = vmatpush1.msra.mxu0 0.0
        %1388 = vmatprep.subr.mxu0 0.0
        %1389 = vmatpush1.msra.mxu0 0.0
        %1390 = vmatprep.subr.mxu0 0.0
        %1391 = vmatpush1.msra.mxu0 0.0
        %1392 = vmatprep.subr.mxu0 0.0
        %1393 = vmatpush1.msra.mxu0 0.0
        %1394 = vmatprep.subr.mxu0 0.0
        %1395 = vmatpush1.msra.mxu0 0.0
        %1396 = vmatprep.subr.mxu0 0.0
        %1397 = vmatpush1.msra.mxu0 0.0
        %1398 = vmatprep.subr.mxu0 0.0
        %1399 = vmatpush1.msra.mxu0 0.0
        %1400 = vmatprep.subr.mxu0 0.0
        %1401 = vmatpush1.msra.mxu0 0.0
        %1402 = vmatprep.subr.mxu0 0.0
        %1403 = vmatpush1.msra.mxu0 0.0
        %1404 = vmatprep.subr.mxu0 0.0
        %1405 = vmatpush1.msra.mxu0 0.0
        %1406 = vmatprep.subr.mxu0 0.0
        %1407 = vmatpush1.msra.mxu0 0.0
        %1408 = vmatprep.subr.mxu0 0.0
        %1409 = vmatpush1.msra.mxu0 0.0
        %1410 = vmatprep.subr.mxu0 0.0
        %1411 = vmatpush1.msra.mxu0 0.0
        %1412 = vmatprep.subr.mxu0 0.0
        %1413 = vmatpush1.msra.mxu0 0.0
        %1414 = vmatprep.subr.mxu0 0.0
        %1415 = vmatpush1.msra.mxu0 0.0
        %1416 = vmatprep.mubr.f32.mxu0 0.0
        %1417 = vmatmul.mubr.f32.gmra.mrb[0].mxu0 %v1350
        %v1418 = vpop.f32.mrb[0].mxu0
        %v1419 = vadd.f32 0.0, %v1418
        %v1420 = vpop.f32.mrb[0].mxu0
        %1421 = vdwg.mxu0
        %v1423 = vsel %vm545, %v1202, 0
        %1425 = vmatprep.subr.mxu0 0.0
        %1426 = vmatpush1.msra.mxu0 %v411
        %1427 = vmatprep.subr.mxu0 0.0
        %1428 = vmatpush1.msra.mxu0 0.0
        %1429 = vmatprep.subr.mxu0 0.0
        %1430 = vmatpush1.msra.mxu0 0.0
        %1431 = vmatprep.subr.mxu0 0.0
        %1432 = vmatpush1.msra.mxu0 0.0
        %1433 = vmatprep.subr.mxu0 0.0
        %1434 = vmatpush1.msra.mxu0 0.0
        %1435 = vmatprep.subr.mxu0 0.0
        %1436 = vmatpush1.msra.mxu0 0.0
        %1437 = vmatprep.subr.mxu0 0.0
        %1438 = vmatpush1.msra.mxu0 0.0
        %1439 = vmatprep.subr.mxu0 0.0
        %1440 = vmatpush1.msra.mxu0 0.0
        %1441 = vmatprep.subr.mxu0 0.0
        %1442 = vmatpush1.msra.mxu0 0.0
        %1443 = vmatprep.subr.mxu0 0.0
        %1444 = vmatpush1.msra.mxu0 0.0
        %1445 = vmatprep.subr.mxu0 0.0
        %1446 = vmatpush1.msra.mxu0 0.0
        %1447 = vmatprep.subr.mxu0 0.0
        %1448 = vmatpush1.msra.mxu0 0.0
        %1449 = vmatprep.subr.mxu0 0.0
        %1450 = vmatpush1.msra.mxu0 0.0
        %1451 = vmatprep.subr.mxu0 0.0
        %1452 = vmatpush1.msra.mxu0 0.0
        %1453 = vmatprep.subr.mxu0 0.0
        %1454 = vmatpush1.msra.mxu0 0.0
        %1455 = vmatprep.subr.mxu0 0.0
        %1456 = vmatpush1.msra.mxu0 0.0
        %1457 = vmatprep.subr.mxu0 0.0
        %1458 = vmatpush1.msra.mxu0 0.0
        %1459 = vmatprep.subr.mxu0 0.0
        %1460 = vmatpush1.msra.mxu0 0.0
        %1461 = vmatprep.subr.mxu0 0.0
        %1462 = vmatpush1.msra.mxu0 0.0
        %1463 = vmatprep.subr.mxu0 0.0
        %1464 = vmatpush1.msra.mxu0 0.0
        %1465 = vmatprep.subr.mxu0 0.0
        %1466 = vmatpush1.msra.mxu0 0.0
        %1467 = vmatprep.subr.mxu0 0.0
        %1468 = vmatpush1.msra.mxu0 0.0
        %1469 = vmatprep.subr.mxu0 0.0
        %1470 = vmatpush1.msra.mxu0 0.0
        %1471 = vmatprep.subr.mxu0 0.0
        %1472 = vmatpush1.msra.mxu0 0.0
        %1473 = vmatprep.subr.mxu0 0.0
        %1474 = vmatpush1.msra.mxu0 0.0
        %1475 = vmatprep.subr.mxu0 0.0
        %1476 = vmatpush1.msra.mxu0 0.0
        %1477 = vmatprep.subr.mxu0 0.0
        %1478 = vmatpush1.msra.mxu0 0.0
        %1479 = vmatprep.subr.mxu0 0.0
        %1480 = vmatpush1.msra.mxu0 0.0
        %1481 = vmatprep.subr.mxu0 0.0
        %1482 = vmatpush1.msra.mxu0 0.0
        %1483 = vmatprep.subr.mxu0 0.0
        %1484 = vmatpush1.msra.mxu0 0.0
        %1485 = vmatprep.subr.mxu0 0.0
        %1486 = vmatpush1.msra.mxu0 0.0
        %1487 = vmatprep.subr.mxu0 0.0
        %1488 = vmatpush1.msra.mxu0 0.0
        %1489 = vmatprep.mubr.f32.mxu0 0.0
        %1490 = vmatmul.mubr.f32.gmra.mrb[0].mxu0 %v1423
        %v1491 = vpop.f32.mrb[0].mxu0
        %v1492 = vadd.f32 0.0, %v1491
        %v1493 = vpop.f32.mrb[0].mxu0
        %1494 = vdwg.mxu0
        %v1495 = vld [vmem:[%s6] sm:$0xff]
        %v1496 = vld [vmem:[%s6 + $0x8] sm:$0xff]
        %v1497 = vld [vmem:[%s6 + $0x10] sm:$0xff]
        %v1498 = vld [vmem:[%s6 + $0x18] sm:$0xff]
        %v1499 = vld [vmem:[%s6 + $0x20] sm:$0xff]
        %v1500 = vld [vmem:[%s6 + $0x28] sm:$0xff]
        %v1501 = vld [vmem:[%s6 + $0x30] sm:$0xff]
        %v1502 = vld [vmem:[%s6 + $0x38] sm:$0xff]
        %v1503 = vld [vmem:[%s7] sm:$0x1]
        %v1505 = vsel %vm858, %v1273, 0
        %v1508 = vsel %vm858, %v1346, 0
        %v1511 = vsel %vm858, %v1419, 0
        %v1514 = vsel %vm858, %v1492, 0
        %1516 = vmatprep.subr.mxu0 0.0
        %1517 = vmatpush1.msra.mxu0 %v1499
        %1518 = vmatprep.subr.mxu0 0.0
        %1519 = vmatpush1.msra.mxu0 %v1500
        %1520 = vmatprep.subr.mxu0 0.0
        %1521 = vmatpush1.msra.mxu0 %v1501
        %1522 = vmatprep.subr.mxu0 0.0
        %1523 = vmatpush1.msra.mxu0 %v1502
        %1524 = vmatprep.subr.mxu0 0.0
        %1525 = vmatpush1.msra.mxu0 0.0
        %1526 = vmatprep.subr.mxu0 0.0
        %1527 = vmatpush1.msra.mxu0 0.0
        %1528 = vmatprep.subr.mxu0 0.0
        %1529 = vmatpush1.msra.mxu0 0.0
        %1530 = vmatprep.subr.mxu0 0.0
        %1531 = vmatpush1.msra.mxu0 0.0
        %1532 = vmatprep.subr.mxu0 0.0
        %1533 = vmatpush1.msra.mxu0 0.0
        %1534 = vmatprep.subr.mxu0 0.0
        %1535 = vmatpush1.msra.mxu0 0.0
        %1536 = vmatprep.subr.mxu0 0.0
        %1537 = vmatpush1.msra.mxu0 0.0
        %1538 = vmatprep.subr.mxu0 0.0
        %1539 = vmatpush1.msra.mxu0 0.0
        %1540 = vmatprep.subr.mxu0 0.0
        %1541 = vmatpush1.msra.mxu0 0.0
        %1542 = vmatprep.subr.mxu0 0.0
        %1543 = vmatpush1.msra.mxu0 0.0
        %1544 = vmatprep.subr.mxu0 0.0
        %1545 = vmatpush1.msra.mxu0 0.0
        %1546 = vmatprep.subr.mxu0 0.0
        %1547 = vmatpush1.msra.mxu0 0.0
        %1548 = vmatprep.subr.mxu0 0.0
        %1549 = vmatpush1.msra.mxu0 0.0
        %1550 = vmatprep.subr.mxu0 0.0
        %1551 = vmatpush1.msra.mxu0 0.0
        %1552 = vmatprep.subr.mxu0 0.0
        %1553 = vmatpush1.msra.mxu0 0.0
        %1554 = vmatprep.subr.mxu0 0.0
        %1555 = vmatpush1.msra.mxu0 0.0
        %1556 = vmatprep.subr.mxu0 0.0
        %1557 = vmatpush1.msra.mxu0 0.0
        %1558 = vmatprep.subr.mxu0 0.0
        %1559 = vmatpush1.msra.mxu0 0.0
        %1560 = vmatprep.subr.mxu0 0.0
        %1561 = vmatpush1.msra.mxu0 0.0
        %1562 = vmatprep.subr.mxu0 0.0
        %1563 = vmatpush1.msra.mxu0 0.0
        %1564 = vmatprep.subr.mxu0 0.0
        %1565 = vmatpush1.msra.mxu0 0.0
        %1566 = vmatprep.subr.mxu0 0.0
        %1567 = vmatpush1.msra.mxu0 0.0
        %1568 = vmatprep.subr.mxu0 0.0
        %1569 = vmatpush1.msra.mxu0 0.0
        %1570 = vmatprep.subr.mxu0 0.0
        %1571 = vmatpush1.msra.mxu0 0.0
        %1572 = vmatprep.subr.mxu0 0.0
        %1573 = vmatpush1.msra.mxu0 0.0
        %1574 = vmatprep.subr.mxu0 0.0
        %1575 = vmatpush1.msra.mxu0 0.0
        %1576 = vmatprep.subr.mxu0 0.0
        %1577 = vmatpush1.msra.mxu0 0.0
        %1578 = vmatprep.subr.mxu0 0.0
        %1579 = vmatpush1.msra.mxu0 0.0
        %1580 = vmatprep.mubr.f32.mxu0 0.0
        %1581 = vmatmul.mubr.f32.gmra.mrb[0].mxu0 %v1505
        %v1582 = vpop.f32.mrb[0].mxu0
        %v1583 = vadd.f32 0.0, %v1582
        %v1584 = vpop.f32.mrb[0].mxu0
        %1585 = vmatprep.mubr.f32.mxu0 0.0
        %1586 = vmatmul.mubr.f32.gmra.mrb[0].mxu0 %v1508
        %v1587 = vpop.f32.mrb[0].mxu0
        %v1588 = vadd.f32 0.0, %v1587
        %v1589 = vpop.f32.mrb[0].mxu0
        %1590 = vmatprep.mubr.f32.mxu0 0.0
        %1591 = vmatmul.mubr.f32.gmra.mrb[0].mxu0 %v1511
        %v1592 = vpop.f32.mrb[0].mxu0
        %v1593 = vadd.f32 0.0, %v1592
        %v1594 = vpop.f32.mrb[0].mxu0
        %1595 = vmatprep.mubr.f32.mxu0 0.0
        %1596 = vmatmul.mubr.f32.gmra.mrb[0].mxu0 %v1514
        %v1597 = vpop.f32.mrb[0].mxu0
        %v1598 = vadd.f32 0.0, %v1597
        %v1599 = vpop.f32.mrb[0].mxu0
        %1600 = vdwg.mxu0
        %1601 = vmatprep.subr.mxu0 0.0
        %1602 = vmatpush1.msra.mxu0 %v1495
        %1603 = vmatprep.subr.mxu0 0.0
        %1604 = vmatpush1.msra.mxu0 %v1496
        %1605 = vmatprep.subr.mxu0 0.0
        %1606 = vmatpush1.msra.mxu0 %v1497
        %1607 = vmatprep.subr.mxu0 0.0
        %1608 = vmatpush1.msra.mxu0 %v1498
        %1609 = vmatprep.subr.mxu0 0.0
        %1610 = vmatpush1.msra.mxu0 0.0
        %1611 = vmatprep.subr.mxu0 0.0
        %1612 = vmatpush1.msra.mxu0 0.0
        %1613 = vmatprep.subr.mxu0 0.0
        %1614 = vmatpush1.msra.mxu0 0.0
        %1615 = vmatprep.subr.mxu0 0.0
        %1616 = vmatpush1.msra.mxu0 0.0
        %1617 = vmatprep.subr.mxu0 0.0
        %1618 = vmatpush1.msra.mxu0 0.0
        %1619 = vmatprep.subr.mxu0 0.0
        %1620 = vmatpush1.msra.mxu0 0.0
        %1621 = vmatprep.subr.mxu0 0.0
        %1622 = vmatpush1.msra.mxu0 0.0
        %1623 = vmatprep.subr.mxu0 0.0
        %1624 = vmatpush1.msra.mxu0 0.0
        %1625 = vmatprep.subr.mxu0 0.0
        %1626 = vmatpush1.msra.mxu0 0.0
        %1627 = vmatprep.subr.mxu0 0.0
        %1628 = vmatpush1.msra.mxu0 0.0
        %1629 = vmatprep.subr.mxu0 0.0
        %1630 = vmatpush1.msra.mxu0 0.0
        %1631 = vmatprep.subr.mxu0 0.0
        %1632 = vmatpush1.msra.mxu0 0.0
        %1633 = vmatprep.subr.mxu0 0.0
        %1634 = vmatpush1.msra.mxu0 0.0
        %1635 = vmatprep.subr.mxu0 0.0
        %1636 = vmatpush1.msra.mxu0 0.0
        %1637 = vmatprep.subr.mxu0 0.0
        %1638 = vmatpush1.msra.mxu0 0.0
        %1639 = vmatprep.subr.mxu0 0.0
        %1640 = vmatpush1.msra.mxu0 0.0
        %1641 = vmatprep.subr.mxu0 0.0
        %1642 = vmatpush1.msra.mxu0 0.0
        %1643 = vmatprep.subr.mxu0 0.0
        %1644 = vmatpush1.msra.mxu0 0.0
        %1645 = vmatprep.subr.mxu0 0.0
        %1646 = vmatpush1.msra.mxu0 0.0
        %1647 = vmatprep.subr.mxu0 0.0
        %1648 = vmatpush1.msra.mxu0 0.0
        %1649 = vmatprep.subr.mxu0 0.0
        %1650 = vmatpush1.msra.mxu0 0.0
        %1651 = vmatprep.subr.mxu0 0.0
        %1652 = vmatpush1.msra.mxu0 0.0
        %1653 = vmatprep.subr.mxu0 0.0
        %1654 = vmatpush1.msra.mxu0 0.0
        %1655 = vmatprep.subr.mxu0 0.0
        %1656 = vmatpush1.msra.mxu0 0.0
        %1657 = vmatprep.subr.mxu0 0.0
        %1658 = vmatpush1.msra.mxu0 0.0
        %1659 = vmatprep.subr.mxu0 0.0
        %1660 = vmatpush1.msra.mxu0 0.0
        %1661 = vmatprep.subr.mxu0 0.0
        %1662 = vmatpush1.msra.mxu0 0.0
        %1663 = vmatprep.subr.mxu0 0.0
        %1664 = vmatpush1.msra.mxu0 0.0
        %1665 = vmatprep.mubr.f32.mxu0 0.0
        %1666 = vmatmul.mubr.f32.gmra.mrb[0].mxu0 %v860
        %v1667 = vpop.f32.mrb[0].mxu0
        %v1668 = vadd.f32 %v1583, %v1667
        %v1669 = vpop.f32.mrb[0].mxu0
        %1670 = vmatprep.mubr.f32.mxu0 0.0
        %1671 = vmatmul.mubr.f32.gmra.mrb[0].mxu0 %v933
        %v1672 = vpop.f32.mrb[0].mxu0
        %v1673 = vadd.f32 %v1588, %v1672
        %v1674 = vpop.f32.mrb[0].mxu0
        %1675 = vmatprep.mubr.f32.mxu0 0.0
        %1676 = vmatmul.mubr.f32.gmra.mrb[0].mxu0 %v1006
        %v1677 = vpop.f32.mrb[0].mxu0
        %v1678 = vadd.f32 %v1593, %v1677
        %v1679 = vpop.f32.mrb[0].mxu0
        %1680 = vmatprep.mubr.f32.mxu0 0.0
        %1681 = vmatmul.mubr.f32.gmra.mrb[0].mxu0 %v1079
        %v1682 = vpop.f32.mrb[0].mxu0
        %v1683 = vadd.f32 %v1598, %v1682
        %v1684 = vpop.f32.mrb[0].mxu0
        %1685 = vdwg.mxu0
        %v1687 = vlaneseq
        %v1688 = vshrl.u32 %v1687, 7
        %v1689 = vsub.s32 0, %v1688
        %v1690 = vrot.slane %v1503, %v1689
        %v1692 = vadd.f32 %v1668, %v1690
        %v1693 = vadd.f32 %v1673, %v1690
        %v1694 = vadd.f32 %v1678, %v1690
        %v1695 = vadd.f32 %v1683, %v1690
        %1696 = vst [vmem:[%s373] sm:$0xff] %v1692
        %1697 = vst [vmem:[%s373 + $0x8] sm:$0xff] %v1693
        %1698 = vst [vmem:[%s373 + $0x10] sm:$0xff] %v1694
        %1699 = vst [vmem:[%s373 + $0x18] sm:$0xff] %v1695
        %s1700 = sand.u32 %s228, 1
        %s1701 = scalar_lea.sflag [#allocation3], %s1700
        %s1702 = sand.u32 %s228, 1
        %s1703 = smul.addr %s1702, 32
        %s1704 = scalar_lea.vmem [#allocation2], %s1703
        // Predicated region
        $region53: #{tpu_custom_call.1} parent=51 // pred_check
          %p1705 = pneg %p238
        $region54: #{tpu_custom_call.1} parent=51 // pred_check_branch
          %1707 = sbr.rel (%p1705) target = $region56
        $region55: #{tpu_custom_call.1} parent=51 // pred_region
          %s1708 = smul.u32 4, %s22
          %s1710 = ssub.s32 512, 512
          %1711 = vsyncadd %s1701, %s1710
          %s1712 = smul.addr %s1708, 128
          %s1713 = scalar_lea.hbm %s8, %s1712
          %s1714 = sshll.u32 %s1704, 4
          %s1715 = int_to_ptr.vmem [resolvable:$true] %s1714
          %1720 = dma.vmem_to_hbm [thread:$0]  %s1715, 512, %s1713, %s1701, 128, 128, 8
        $region56: #{tpu_custom_call.1} parent=51 // pred_fallthru
          _
      $region52: #{tpu_custom_call.1} parent=5 // pred_fallthru
        _
      %p1721 = scmp.le.s32.totalorder 2, %s17
      // Predicated region
      $region57: #{tpu_custom_call.1} parent=5 // pred_check
        %p1722 = pneg %p1721
      $region58: #{tpu_custom_call.1} parent=5 // pred_check_branch
        %1724 = sbr.rel (%p1722) target = $region60
      $region59: #{tpu_custom_call.1} parent=5 // pred_region
        %s1725 = ssub.s32 %s17, 2
        // Predicated region
        $region61: #{tpu_custom_call.1} parent=59 // pred_check
          %p1726 = pneg %p244
        $region62: #{tpu_custom_call.1} parent=59 // pred_check_branch
          %1728 = sbr.rel (%p1726) target = $region64
        $region63: #{tpu_custom_call.1} parent=59 // pred_region
          %s1729 = sand.u32 %s229, 1
          %s1730 = scalar_lea.sflag [#allocation3], %s1729
          %s1731 = sand.u32 %s229, 1
          %s1732 = smul.addr %s1731, 32
          %s1733 = scalar_lea.vmem [#allocation2], %s1732
          %1734 = dma.done %s1730, 512
        $region64: #{tpu_custom_call.1} parent=59 // pred_fallthru
          _
      $region60: #{tpu_custom_call.1} parent=5 // pred_fallthru
        _
    $region6: #{tpu_custom_call.1} parent=1 // loop_footer
      %s21 = sadd.s32 1, %s17
    $region7: #{tpu_custom_call.1} parent=1 // loop_footer_branch
      %16 = sbr.rel target = $region3
    $region8: #{tpu_custom_call.1} parent=1 // loop_exit
      _
    %1735 = vsyncpa [#allocation3], 1
    %s1736 = scalar_lea.sflag [#allocation3], 1
    %1737 = vsyncpa %s1736, 1

</llo_original>
